<compile_context>
chip_gen: v7x
topology: tpu7x:2x2x1
jax: 0.10.0
libtpu: 0.0.40
codegen_flags: <defaults>
</compile_context>

<pallas_src>
import functools

import jax
import jax.numpy as jnp
from jax.experimental import pallas as pl
from jax.experimental.pallas import tpu as pltpu

CHUNK = 8  # timesteps per grid step; 8 rows == one f32 sublane tile of output


def _gru_chunk_kernel(gi_ref,       # (CHUNK, 3H) f32  precomputed x@Wih^T + folded biases
                      h0_ref,       # (1, H)      f32  initial hidden (resident)
                      whh_ref,      # (H, 3H)     compute dtype, Whh^T (resident)
                      bhn_ref,      # (1, H)      f32  b_hh n-gate slice (resident)
                      out_ref,      # (CHUNK, H)  f32  hidden/output rows for this chunk
                      h_scr,        # VMEM (1, H) f32  carried hidden state
                      *, seq_len, hidden_size, chunk):
    H = hidden_size
    f32 = jnp.float32

    @pl.when(pl.program_id(0) == 0)
    def _():
        h_scr[...] = h0_ref[...]

    base = pl.program_id(0) * chunk
    h = h_scr[...]
    w = whh_ref[...]
    bhn = bhn_ref[...]
    rem = seq_len % chunk

    rows = []
    # Static unrolled loop over the chunk: full LLO scheduler visibility,
    # gi_ref[i:i+1] slices are free static views of the resident block.
    for i in range(chunk):
        gi = gi_ref[i:i + 1, :]                                   # (1, 3H)
        gh = jnp.dot(h.astype(w.dtype), w,
                     preferred_element_type=f32)                  # (1, 3H)
        r = jax.nn.sigmoid(gi[:, :H] + gh[:, :H])
        z = jax.nn.sigmoid(gi[:, H:2 * H] + gh[:, H:2 * H])
        n = jnp.tanh(gi[:, 2 * H:] + r * (gh[:, 2 * H:] + bhn))
        h_new = (1.0 - z) * n + z * h
        if rem != 0 and i >= rem:                                 # only possible pad slots
            h_new = jnp.where(base + i < seq_len, h_new, h)
        h = h_new
        rows.append(h)

    out_ref[...] = jnp.concatenate(rows, axis=0)                  # one dense (CHUNK,H) store
    h_scr[...] = h


def prepare_params(params, compute_dtype=jnp.bfloat16):
    """One-time weight preprocessing (NOT per step).

    bf16 by default: halves resident weight VMEM + DMA; matmuls still accumulate
    in f32 and all gate math is f32. Pass compute_dtype=jnp.float32 for exact
    parity with the f32 reference.
    """
    H = params["gru_whh"].shape[1]
    b_ih = params["gru_bih"].astype(jnp.float32)
    b_hh = params["gru_bhh"].astype(jnp.float32)
    # Fold b_ih fully and the r/z part of b_hh into the precomputed GI; only the
    # n-gate b_hh stays separate (it must be multiplied by r).
    bias_fold = b_ih + jnp.concatenate([b_hh[:2 * H], jnp.zeros((H,), jnp.float32)])
    return {
        "hidden_size": H,
        "emb": params["embedding"].astype(compute_dtype),          # (V, H)
        "wih_t": params["gru_wih"].T.astype(compute_dtype),        # (H, 3H)
        "whh_t": params["gru_whh"].T.astype(compute_dtype),        # (H, 3H)
        "bias_fold": bias_fold[None, :],                           # (1, 3H) f32
        "b_hn": b_hh[2 * H:][None, :],                             # (1, H)  f32
    }


def encoder_rnn_sequence(tokens, hidden, prep, chunk=CHUNK):
    """Run the encoder over a token sequence.

    tokens: (T,) int; hidden: (1,1,H) f32 or None.
    Returns (outputs (T,1,H) f32, final hidden (1,1,H) f32).
    """
    H = prep["hidden_size"]
    V = prep["emb"].shape[0]
    T = int(tokens.shape[0])
    if hidden is None:
        hidden = jnp.zeros((1, 1, H), jnp.float32)
    h0 = hidden.reshape(1, H).astype(jnp.float32)
    # NOTE: clip remaps out-of-range ids instead of failing like nn.Embedding.
    tok = jnp.clip(tokens.reshape(T).astype(jnp.int32), 0, V - 1)

    # ---- hoisted, non-recurrent work (one big matmul, fills MXU rows) ----
    x = jnp.take(prep["emb"], tok, axis=0)                          # (T, H)
    gi = jnp.dot(x, prep["wih_t"],
                 preferred_element_type=jnp.float32) + prep["bias_fold"]  # (T, 3H) f32

    n_chunks = pl.cdiv(T, chunk)
    t_pad = n_chunks * chunk
    if t_pad != T:
        gi = jnp.pad(gi, ((0, t_pad - T), (0, 0)))

    kernel = functools.partial(_gru_chunk_kernel,
                               seq_len=T, hidden_size=H, chunk=chunk)

    grid_spec = pltpu.PrefetchScalarGridSpec(
        num_scalar_prefetch=0,
        grid=(n_chunks,),
        in_specs=[
            pl.BlockSpec((chunk, 3 * H), lambda c: (c, 0)),   # GI chunk (streamed)
            pl.BlockSpec((1, H), lambda c: (0, 0)),           # h0 (resident)
            pl.BlockSpec((H, 3 * H), lambda c: (0, 0)),       # Whh^T (resident)
            pl.BlockSpec((1, H), lambda c: (0, 0)),           # b_hn (resident)
        ],
        out_specs=pl.BlockSpec((chunk, H), lambda c: (c, 0)), # dense (8,H) tiles
        scratch_shapes=[pltpu.VMEM((1, H), jnp.float32)],     # carried hidden
    )

    outs = pl.pallas_call(
        kernel,
        out_shape=jax.ShapeDtypeStruct((t_pad, H), jnp.float32),
        grid_spec=grid_spec,
        compiler_params=pltpu.CompilerParams(
            dimension_semantics=("arbitrary",),               # sequential carry over time
            vmem_limit_bytes=32 * 1024 * 1024),
    )(gi, h0, prep["whh_t"], prep["b_hn"])

    outputs = outs[:T].reshape(T, 1, H)
    h_final = outs[T - 1].reshape(1, 1, H)                    # output_t == hidden_t
    return outputs, h_final


def encoder_rnn_forward(token, hidden, prep):
    """Exact EncoderRNN.forward semantics: one token -> (output (1,1,H), hidden (1,1,H))."""
    outputs, h_final = encoder_rnn_sequence(jnp.ravel(jnp.asarray(token))[:1], hidden, prep)
    return outputs.reshape(1, 1, -1), h_final


# ------------------------------- reference ---------------------------------
def reference_encoder_sequence(tokens, hidden, params):
    H = params["gru_whh"].shape[1]
    if hidden is None:
        hidden = jnp.zeros((1, 1, H), jnp.float32)
    h = hidden.reshape(1, H)
    outs = []
    for t in range(tokens.shape[0]):
        x = params["embedding"][tokens[t]][None, :]
        gi = x @ params["gru_wih"].T + params["gru_bih"]
        gh = h @ params["gru_whh"].T + params["gru_bhh"]
        r = jax.nn.sigmoid(gi[:, :H] + gh[:, :H])
        z = jax.nn.sigmoid(gi[:, H:2 * H] + gh[:, H:2 * H])
        n = jnp.tanh(gi[:, 2 * H:] + r * gh[:, 2 * H:])
        h = (1.0 - z) * n + z * h
        outs.append(h)
    return jnp.stack(outs).reshape(-1, 1, H), h.reshape(1, 1, H)


if __name__ == "__main__":
    V, H, T = 64, 128, 13                      # vocab, hidden size, sequence length
    key = jax.random.PRNGKey(0)
    ks = jax.random.split(key, 8)

    def u(k, shape, scale=0.2):
        return jax.random.uniform(k, shape, jnp.float32, -scale, scale)

    params = {
        "embedding": u(ks[0], (V, H), 1.0),
        "gru_wih": u(ks[1], (3 * H, H)),
        "gru_whh": u(ks[2], (3 * H, H)),
        "gru_bih": u(ks[3], (3 * H,)),
        "gru_bhh": u(ks[4], (3 * H,)),
    }

    prep_f32 = prepare_params(params, compute_dtype=jnp.float32)   # exact path
    prep_bf16 = prepare_params(params)                             # default perf path (bf16 weights)

    # --- single-step call, identical to EncoderRNN.forward(input, hidden=None) ---
    token = jnp.array([[3]], dtype=jnp.int32)
    out1, hid1 = encoder_rnn_forward(token, None, prep_f32)
    jax.block_until_ready((out1, hid1))
    out1_r, hid1_r = reference_encoder_sequence(jnp.array([3], jnp.int32), None, params)
    assert jnp.allclose(out1, out1_r.reshape(1, 1, H), atol=5e-4), "single-step output mismatch"
    assert jnp.allclose(hid1, hid1_r, atol=5e-4), "single-step hidden mismatch"

    # --- full-sequence call: T steps, chunked into (8,H) tiles in ONE pallas_call ---
    tokens = jax.random.randint(ks[5], (T,), 0, V, jnp.int32)
    hidden0 = u(ks[6], (1, 1, H), 1.0)
    outs_r, h_fin_r = reference_encoder_sequence(tokens, hidden0, params)

    outs, h_fin = encoder_rnn_sequence(tokens, hidden0, prep_f32)
    jax.block_until_ready((outs, h_fin))
    assert jnp.allclose(outs, outs_r, atol=5e-4), "f32 sequence outputs mismatch"
    assert jnp.allclose(h_fin, h_fin_r, atol=5e-4), "f32 final hidden mismatch"

    outs_b, h_fin_b = encoder_rnn_sequence(tokens, hidden0, prep_bf16)
    jax.block_until_ready((outs_b, h_fin_b))
    assert jnp.allclose(outs_b, outs_r, atol=5e-2), "bf16 sequence outputs mismatch"
    assert jnp.allclose(h_fin_b, h_fin_r, atol=5e-2), "bf16 final hidden mismatch"

    print("KERNEL_OK")
</pallas_src>

<mosaic_0001>
module attributes {stable_mosaic.version = 11 : i64} {
  func.func @_gru_chunk_kernel(%arg0: i32, %arg1: memref<8x384xf32, #tpu.memory_space<vmem>>, %arg2: memref<1x128xf32, #tpu.memory_space<vmem>>, %arg3: memref<128x384xf32, #tpu.memory_space<vmem>>, %arg4: memref<1x128xf32, #tpu.memory_space<vmem>>, %arg5: memref<8x128xf32, #tpu.memory_space<vmem>>, %arg6: memref<1x128xf32, #tpu.memory_space<vmem>>) attributes {dimension_semantics = [#tpu.dimension_semantics<arbitrary>], iteration_bounds = array<i64: 1>, scalar_prefetch = 0 : i64, scratch_operands = 1 : i64, tpu.core_type = #tpu.core_type<tc>, window_params = [{transform_indices = @transform_0, window_bounds = array<i64: 8, 384>}, {pipeline_mode = #tpu.pipeline_mode<synchronous>, transform_indices = @transform_1, window_bounds = array<i64: 1, 128>}, {pipeline_mode = #tpu.pipeline_mode<synchronous>, transform_indices = @transform_2, window_bounds = array<i64: 128, 384>}, {pipeline_mode = #tpu.pipeline_mode<synchronous>, transform_indices = @transform_3, window_bounds = array<i64: 1, 128>}, {transform_indices = @transform_4, window_bounds = array<i64: 8, 128>}]} {
    %c0_i32 = arith.constant 0 : i32
    %0 = arith.cmpi eq, %arg0, %c0_i32 : i32
    %1 = arith.extui %0 : i1 to i32
    %c0_i32_0 = arith.constant 0 : i32
    %2 = arith.cmpi ne, %1, %c0_i32_0 : i32
    scf.if %2 {
      %c0_57 = arith.constant 0 : index
      %c0_58 = arith.constant 0 : index
      %263 = vector.load %arg2[%c0_57, %c0_58] : memref<1x128xf32, #tpu.memory_space<vmem>>, vector<1x128xf32>
      %c0_59 = arith.constant 0 : index
      %c0_60 = arith.constant 0 : index
      %264 = vector.load %arg6[%c0_59, %c0_60] : memref<1x128xf32, #tpu.memory_space<vmem>>, vector<1x128xf32>
      tpu.vector_store %arg6[%c0_59, %c0_60], %263 {strides = array<i32>} : memref<1x128xf32, #tpu.memory_space<vmem>>, vector<1x128xf32>,
    } else {
    }
    %c8_i32 = arith.constant 8 : i32
    %3 = arith.muli %arg0, %c8_i32 : i32
    %c0 = arith.constant 0 : index
    %c0_1 = arith.constant 0 : index
    %4 = vector.load %arg6[%c0, %c0_1] : memref<1x128xf32, #tpu.memory_space<vmem>>, vector<1x128xf32>
    %c0_2 = arith.constant 0 : index
    %c0_3 = arith.constant 0 : index
    %5 = vector.load %arg3[%c0_2, %c0_3] : memref<128x384xf32, #tpu.memory_space<vmem>>, vector<128x384xf32>
    %c0_4 = arith.constant 0 : index
    %c0_5 = arith.constant 0 : index
    %6 = vector.load %arg4[%c0_4, %c0_5] : memref<1x128xf32, #tpu.memory_space<vmem>>, vector<1x128xf32>
    %c0_6 = arith.constant 0 : index
    %c0_7 = arith.constant 0 : index
    %7 = vector.load %arg1[%c0_6, %c0_7] : memref<8x384xf32, #tpu.memory_space<vmem>>, vector<1x384xf32>
    %cst = arith.constant dense<0.000000e+00> : vector<1x384xf32>
    %8 = tpu.matmul %4, %5, %cst {dimension_numbers = #tpu.dot_dimension_numbers<[1], [0], [0], [1], [0, 0, 1, 1], [], []>} : vector<1x128xf32>, vector<128x384xf32>, vector<1x384xf32> -> vector<1x384xf32>
    %9 = vector.extract_strided_slice %7 {offsets = [0, 0], sizes = [1, 128], strides = [1, 1]} : vector<1x384xf32> to vector<1x128xf32>
    %10 = vector.extract_strided_slice %8 {offsets = [0, 0], sizes = [1, 128], strides = [1, 1]} : vector<1x384xf32> to vector<1x128xf32>
    %11 = arith.addf %9, %10 : vector<1x128xf32>
    %12 = arith.negf %11 : vector<1x128xf32>
    %13 = math.exp %12 : vector<1x128xf32>
    %cst_8 = arith.constant 1.000000e+00 : f32
    %14 = vector.broadcast %cst_8 : f32 to vector<1x128xf32>
    %15 = arith.addf %14, %13 : vector<1x128xf32>
    %16 = arith.divf %14, %15 : vector<1x128xf32>
    %17 = vector.extract_strided_slice %7 {offsets = [0, 128], sizes = [1, 128], strides = [1, 1]} : vector<1x384xf32> to vector<1x128xf32>
    %18 = vector.extract_strided_slice %8 {offsets = [0, 128], sizes = [1, 128], strides = [1, 1]} : vector<1x384xf32> to vector<1x128xf32>
    %19 = arith.addf %17, %18 : vector<1x128xf32>
    %20 = arith.negf %19 : vector<1x128xf32>
    %21 = math.exp %20 : vector<1x128xf32>
    %cst_9 = arith.constant 1.000000e+00 : f32
    %22 = vector.broadcast %cst_9 : f32 to vector<1x128xf32>
    %23 = arith.addf %22, %21 : vector<1x128xf32>
    %24 = arith.divf %22, %23 : vector<1x128xf32>
    %25 = vector.extract_strided_slice %7 {offsets = [0, 256], sizes = [1, 128], strides = [1, 1]} : vector<1x384xf32> to vector<1x128xf32>
    %26 = vector.extract_strided_slice %8 {offsets = [0, 256], sizes = [1, 128], strides = [1, 1]} : vector<1x384xf32> to vector<1x128xf32>
    %27 = arith.addf %26, %6 : vector<1x128xf32>
    %28 = arith.mulf %16, %27 : vector<1x128xf32>
    %29 = arith.addf %25, %28 : vector<1x128xf32>
    %30 = math.tanh %29 : vector<1x128xf32>
    %cst_10 = arith.constant 1.000000e+00 : f32
    %31 = vector.broadcast %cst_10 : f32 to vector<1x128xf32>
    %32 = arith.subf %31, %24 : vector<1x128xf32>
    %33 = arith.mulf %32, %30 : vector<1x128xf32>
    %34 = arith.mulf %24, %4 : vector<1x128xf32>
    %35 = arith.addf %33, %34 : vector<1x128xf32>
    %c1 = arith.constant 1 : index
    %c0_11 = arith.constant 0 : index
    %36 = vector.load %arg1[%c1, %c0_11] : memref<8x384xf32, #tpu.memory_space<vmem>>, vector<1x384xf32>
    %cst_12 = arith.constant dense<0.000000e+00> : vector<1x384xf32>
    %37 = tpu.matmul %35, %5, %cst_12 {dimension_numbers = #tpu.dot_dimension_numbers<[1], [0], [0], [1], [0, 0, 1, 1], [], []>} : vector<1x128xf32>, vector<128x384xf32>, vector<1x384xf32> -> vector<1x384xf32>
    %38 = vector.extract_strided_slice %36 {offsets = [0, 0], sizes = [1, 128], strides = [1, 1]} : vector<1x384xf32> to vector<1x128xf32>
    %39 = vector.extract_strided_slice %37 {offsets = [0, 0], sizes = [1, 128], strides = [1, 1]} : vector<1x384xf32> to vector<1x128xf32>
    %40 = arith.addf %38, %39 : vector<1x128xf32>
    %41 = arith.negf %40 : vector<1x128xf32>
    %42 = math.exp %41 : vector<1x128xf32>
    %cst_13 = arith.constant 1.000000e+00 : f32
    %43 = vector.broadcast %cst_13 : f32 to vector<1x128xf32>
    %44 = arith.addf %43, %42 : vector<1x128xf32>
    %45 = arith.divf %43, %44 : vector<1x128xf32>
    %46 = vector.extract_strided_slice %36 {offsets = [0, 128], sizes = [1, 128], strides = [1, 1]} : vector<1x384xf32> to vector<1x128xf32>
    %47 = vector.extract_strided_slice %37 {offsets = [0, 128], sizes = [1, 128], strides = [1, 1]} : vector<1x384xf32> to vector<1x128xf32>
    %48 = arith.addf %46, %47 : vector<1x128xf32>
    %49 = arith.negf %48 : vector<1x128xf32>
    %50 = math.exp %49 : vector<1x128xf32>
    %cst_14 = arith.constant 1.000000e+00 : f32
    %51 = vector.broadcast %cst_14 : f32 to vector<1x128xf32>
    %52 = arith.addf %51, %50 : vector<1x128xf32>
    %53 = arith.divf %51, %52 : vector<1x128xf32>
    %54 = vector.extract_strided_slice %36 {offsets = [0, 256], sizes = [1, 128], strides = [1, 1]} : vector<1x384xf32> to vector<1x128xf32>
    %55 = vector.extract_strided_slice %37 {offsets = [0, 256], sizes = [1, 128], strides = [1, 1]} : vector<1x384xf32> to vector<1x128xf32>
    %56 = arith.addf %55, %6 : vector<1x128xf32>
    %57 = arith.mulf %45, %56 : vector<1x128xf32>
    %58 = arith.addf %54, %57 : vector<1x128xf32>
    %59 = math.tanh %58 : vector<1x128xf32>
    %cst_15 = arith.constant 1.000000e+00 : f32
    %60 = vector.broadcast %cst_15 : f32 to vector<1x128xf32>
    %61 = arith.subf %60, %53 : vector<1x128xf32>
    %62 = arith.mulf %61, %59 : vector<1x128xf32>
    %63 = arith.mulf %53, %35 : vector<1x128xf32>
    %64 = arith.addf %62, %63 : vector<1x128xf32>
    %c1_i32 = arith.constant 1 : i32
    %65 = arith.addi %3, %c1_i32 : i32
    %c1_i32_16 = arith.constant 1 : i32
    %66 = arith.cmpi slt, %65, %c1_i32_16 : i32
    %67 = arith.select %66, %64, %35 : vector<1x128xf32>
    %c2 = arith.constant 2 : index
    %c0_17 = arith.constant 0 : index
    %68 = vector.load %arg1[%c2, %c0_17] : memref<8x384xf32, #tpu.memory_space<vmem>>, vector<1x384xf32>
    %cst_18 = arith.constant dense<0.000000e+00> : vector<1x384xf32>
    %69 = tpu.matmul %67, %5, %cst_18 {dimension_numbers = #tpu.dot_dimension_numbers<[1], [0], [0], [1], [0, 0, 1, 1], [], []>} : vector<1x128xf32>, vector<128x384xf32>, vector<1x384xf32> -> vector<1x384xf32>
    %70 = vector.extract_strided_slice %68 {offsets = [0, 0], sizes = [1, 128], strides = [1, 1]} : vector<1x384xf32> to vector<1x128xf32>
    %71 = vector.extract_strided_slice %69 {offsets = [0, 0], sizes = [1, 128], strides = [1, 1]} : vector<1x384xf32> to vector<1x128xf32>
    %72 = arith.addf %70, %71 : vector<1x128xf32>
    %73 = arith.negf %72 : vector<1x128xf32>
    %74 = math.exp %73 : vector<1x128xf32>
    %cst_19 = arith.constant 1.000000e+00 : f32
    %75 = vector.broadcast %cst_19 : f32 to vector<1x128xf32>
    %76 = arith.addf %75, %74 : vector<1x128xf32>
    %77 = arith.divf %75, %76 : vector<1x128xf32>
    %78 = vector.extract_strided_slice %68 {offsets = [0, 128], sizes = [1, 128], strides = [1, 1]} : vector<1x384xf32> to vector<1x128xf32>
    %79 = vector.extract_strided_slice %69 {offsets = [0, 128], sizes = [1, 128], strides = [1, 1]} : vector<1x384xf32> to vector<1x128xf32>
    %80 = arith.addf %78, %79 : vector<1x128xf32>
    %81 = arith.negf %80 : vector<1x128xf32>
    %82 = math.exp %81 : vector<1x128xf32>
    %cst_20 = arith.constant 1.000000e+00 : f32
    %83 = vector.broadcast %cst_20 : f32 to vector<1x128xf32>
    %84 = arith.addf %83, %82 : vector<1x128xf32>
    %85 = arith.divf %83, %84 : vector<1x128xf32>
    %86 = vector.extract_strided_slice %68 {offsets = [0, 256], sizes = [1, 128], strides = [1, 1]} : vector<1x384xf32> to vector<1x128xf32>
    %87 = vector.extract_strided_slice %69 {offsets = [0, 256], sizes = [1, 128], strides = [1, 1]} : vector<1x384xf32> to vector<1x128xf32>
    %88 = arith.addf %87, %6 : vector<1x128xf32>
    %89 = arith.mulf %77, %88 : vector<1x128xf32>
    %90 = arith.addf %86, %89 : vector<1x128xf32>
    %91 = math.tanh %90 : vector<1x128xf32>
    %cst_21 = arith.constant 1.000000e+00 : f32
    %92 = vector.broadcast %cst_21 : f32 to vector<1x128xf32>
    %93 = arith.subf %92, %85 : vector<1x128xf32>
    %94 = arith.mulf %93, %91 : vector<1x128xf32>
    %95 = arith.mulf %85, %67 : vector<1x128xf32>
    %96 = arith.addf %94, %95 : vector<1x128xf32>
    %c2_i32 = arith.constant 2 : i32
    %97 = arith.addi %3, %c2_i32 : i32
    %c1_i32_22 = arith.constant 1 : i32
    %98 = arith.cmpi slt, %97, %c1_i32_22 : i32
    %99 = arith.select %98, %96, %67 : vector<1x128xf32>
    %c3 = arith.constant 3 : index
    %c0_23 = arith.constant 0 : index
    %100 = vector.load %arg1[%c3, %c0_23] : memref<8x384xf32, #tpu.memory_space<vmem>>, vector<1x384xf32>
    %cst_24 = arith.constant dense<0.000000e+00> : vector<1x384xf32>
    %101 = tpu.matmul %99, %5, %cst_24 {dimension_numbers = #tpu.dot_dimension_numbers<[1], [0], [0], [1], [0, 0, 1, 1], [], []>} : vector<1x128xf32>, vector<128x384xf32>, vector<1x384xf32> -> vector<1x384xf32>
    %102 = vector.extract_strided_slice %100 {offsets = [0, 0], sizes = [1, 128], strides = [1, 1]} : vector<1x384xf32> to vector<1x128xf32>
    %103 = vector.extract_strided_slice %101 {offsets = [0, 0], sizes = [1, 128], strides = [1, 1]} : vector<1x384xf32> to vector<1x128xf32>
    %104 = arith.addf %102, %103 : vector<1x128xf32>
    %105 = arith.negf %104 : vector<1x128xf32>
    %106 = math.exp %105 : vector<1x128xf32>
    %cst_25 = arith.constant 1.000000e+00 : f32
    %107 = vector.broadcast %cst_25 : f32 to vector<1x128xf32>
    %108 = arith.addf %107, %106 : vector<1x128xf32>
    %109 = arith.divf %107, %108 : vector<1x128xf32>
    %110 = vector.extract_strided_slice %100 {offsets = [0, 128], sizes = [1, 128], strides = [1, 1]} : vector<1x384xf32> to vector<1x128xf32>
    %111 = vector.extract_strided_slice %101 {offsets = [0, 128], sizes = [1, 128], strides = [1, 1]} : vector<1x384xf32> to vector<1x128xf32>
    %112 = arith.addf %110, %111 : vector<1x128xf32>
    %113 = arith.negf %112 : vector<1x128xf32>
    %114 = math.exp %113 : vector<1x128xf32>
    %cst_26 = arith.constant 1.000000e+00 : f32
    %115 = vector.broadcast %cst_26 : f32 to vector<1x128xf32>
    %116 = arith.addf %115, %114 : vector<1x128xf32>
    %117 = arith.divf %115, %116 : vector<1x128xf32>
    %118 = vector.extract_strided_slice %100 {offsets = [0, 256], sizes = [1, 128], strides = [1, 1]} : vector<1x384xf32> to vector<1x128xf32>
    %119 = vector.extract_strided_slice %101 {offsets = [0, 256], sizes = [1, 128], strides = [1, 1]} : vector<1x384xf32> to vector<1x128xf32>
    %120 = arith.addf %119, %6 : vector<1x128xf32>
    %121 = arith.mulf %109, %120 : vector<1x128xf32>
    %122 = arith.addf %118, %121 : vector<1x128xf32>
    %123 = math.tanh %122 : vector<1x128xf32>
    %cst_27 = arith.constant 1.000000e+00 : f32
    %124 = vector.broadcast %cst_27 : f32 to vector<1x128xf32>
    %125 = arith.subf %124, %117 : vector<1x128xf32>
    %126 = arith.mulf %125, %123 : vector<1x128xf32>
    %127 = arith.mulf %117, %99 : vector<1x128xf32>
    %128 = arith.addf %126, %127 : vector<1x128xf32>
    %c3_i32 = arith.constant 3 : i32
    %129 = arith.addi %3, %c3_i32 : i32
    %c1_i32_28 = arith.constant 1 : i32
    %130 = arith.cmpi slt, %129, %c1_i32_28 : i32
    %131 = arith.select %130, %128, %99 : vector<1x128xf32>
    %c4 = arith.constant 4 : index
    %c0_29 = arith.constant 0 : index
    %132 = vector.load %arg1[%c4, %c0_29] : memref<8x384xf32, #tpu.memory_space<vmem>>, vector<1x384xf32>
    %cst_30 = arith.constant dense<0.000000e+00> : vector<1x384xf32>
    %133 = tpu.matmul %131, %5, %cst_30 {dimension_numbers = #tpu.dot_dimension_numbers<[1], [0], [0], [1], [0, 0, 1, 1], [], []>} : vector<1x128xf32>, vector<128x384xf32>, vector<1x384xf32> -> vector<1x384xf32>
    %134 = vector.extract_strided_slice %132 {offsets = [0, 0], sizes = [1, 128], strides = [1, 1]} : vector<1x384xf32> to vector<1x128xf32>
    %135 = vector.extract_strided_slice %133 {offsets = [0, 0], sizes = [1, 128], strides = [1, 1]} : vector<1x384xf32> to vector<1x128xf32>
    %136 = arith.addf %134, %135 : vector<1x128xf32>
    %137 = arith.negf %136 : vector<1x128xf32>
    %138 = math.exp %137 : vector<1x128xf32>
    %cst_31 = arith.constant 1.000000e+00 : f32
    %139 = vector.broadcast %cst_31 : f32 to vector<1x128xf32>
    %140 = arith.addf %139, %138 : vector<1x128xf32>
    %141 = arith.divf %139, %140 : vector<1x128xf32>
    %142 = vector.extract_strided_slice %132 {offsets = [0, 128], sizes = [1, 128], strides = [1, 1]} : vector<1x384xf32> to vector<1x128xf32>
    %143 = vector.extract_strided_slice %133 {offsets = [0, 128], sizes = [1, 128], strides = [1, 1]} : vector<1x384xf32> to vector<1x128xf32>
    %144 = arith.addf %142, %143 : vector<1x128xf32>
    %145 = arith.negf %144 : vector<1x128xf32>
    %146 = math.exp %145 : vector<1x128xf32>
    %cst_32 = arith.constant 1.000000e+00 : f32
    %147 = vector.broadcast %cst_32 : f32 to vector<1x128xf32>
    %148 = arith.addf %147, %146 : vector<1x128xf32>
    %149 = arith.divf %147, %148 : vector<1x128xf32>
    %150 = vector.extract_strided_slice %132 {offsets = [0, 256], sizes = [1, 128], strides = [1, 1]} : vector<1x384xf32> to vector<1x128xf32>
    %151 = vector.extract_strided_slice %133 {offsets = [0, 256], sizes = [1, 128], strides = [1, 1]} : vector<1x384xf32> to vector<1x128xf32>
    %152 = arith.addf %151, %6 : vector<1x128xf32>
    %153 = arith.mulf %141, %152 : vector<1x128xf32>
    %154 = arith.addf %150, %153 : vector<1x128xf32>
    %155 = math.tanh %154 : vector<1x128xf32>
    %cst_33 = arith.constant 1.000000e+00 : f32
    %156 = vector.broadcast %cst_33 : f32 to vector<1x128xf32>
    %157 = arith.subf %156, %149 : vector<1x128xf32>
    %158 = arith.mulf %157, %155 : vector<1x128xf32>
    %159 = arith.mulf %149, %131 : vector<1x128xf32>
    %160 = arith.addf %158, %159 : vector<1x128xf32>
    %c4_i32 = arith.constant 4 : i32
    %161 = arith.addi %3, %c4_i32 : i32
    %c1_i32_34 = arith.constant 1 : i32
    %162 = arith.cmpi slt, %161, %c1_i32_34 : i32
    %163 = arith.select %162, %160, %131 : vector<1x128xf32>
    %c5 = arith.constant 5 : index
    %c0_35 = arith.constant 0 : index
    %164 = vector.load %arg1[%c5, %c0_35] : memref<8x384xf32, #tpu.memory_space<vmem>>, vector<1x384xf32>
    %cst_36 = arith.constant dense<0.000000e+00> : vector<1x384xf32>
    %165 = tpu.matmul %163, %5, %cst_36 {dimension_numbers = #tpu.dot_dimension_numbers<[1], [0], [0], [1], [0, 0, 1, 1], [], []>} : vector<1x128xf32>, vector<128x384xf32>, vector<1x384xf32> -> vector<1x384xf32>
    %166 = vector.extract_strided_slice %164 {offsets = [0, 0], sizes = [1, 128], strides = [1, 1]} : vector<1x384xf32> to vector<1x128xf32>
    %167 = vector.extract_strided_slice %165 {offsets = [0, 0], sizes = [1, 128], strides = [1, 1]} : vector<1x384xf32> to vector<1x128xf32>
    %168 = arith.addf %166, %167 : vector<1x128xf32>
    %169 = arith.negf %168 : vector<1x128xf32>
    %170 = math.exp %169 : vector<1x128xf32>
    %cst_37 = arith.constant 1.000000e+00 : f32
    %171 = vector.broadcast %cst_37 : f32 to vector<1x128xf32>
    %172 = arith.addf %171, %170 : vector<1x128xf32>
    %173 = arith.divf %171, %172 : vector<1x128xf32>
    %174 = vector.extract_strided_slice %164 {offsets = [0, 128], sizes = [1, 128], strides = [1, 1]} : vector<1x384xf32> to vector<1x128xf32>
    %175 = vector.extract_strided_slice %165 {offsets = [0, 128], sizes = [1, 128], strides = [1, 1]} : vector<1x384xf32> to vector<1x128xf32>
    %176 = arith.addf %174, %175 : vector<1x128xf32>
    %177 = arith.negf %176 : vector<1x128xf32>
    %178 = math.exp %177 : vector<1x128xf32>
    %cst_38 = arith.constant 1.000000e+00 : f32
    %179 = vector.broadcast %cst_38 : f32 to vector<1x128xf32>
    %180 = arith.addf %179, %178 : vector<1x128xf32>
    %181 = arith.divf %179, %180 : vector<1x128xf32>
    %182 = vector.extract_strided_slice %164 {offsets = [0, 256], sizes = [1, 128], strides = [1, 1]} : vector<1x384xf32> to vector<1x128xf32>
    %183 = vector.extract_strided_slice %165 {offsets = [0, 256], sizes = [1, 128], strides = [1, 1]} : vector<1x384xf32> to vector<1x128xf32>
    %184 = arith.addf %183, %6 : vector<1x128xf32>
    %185 = arith.mulf %173, %184 : vector<1x128xf32>
    %186 = arith.addf %182, %185 : vector<1x128xf32>
    %187 = math.tanh %186 : vector<1x128xf32>
    %cst_39 = arith.constant 1.000000e+00 : f32
    %188 = vector.broadcast %cst_39 : f32 to vector<1x128xf32>
    %189 = arith.subf %188, %181 : vector<1x128xf32>
    %190 = arith.mulf %189, %187 : vector<1x128xf32>
    %191 = arith.mulf %181, %163 : vector<1x128xf32>
    %192 = arith.addf %190, %191 : vector<1x128xf32>
    %c5_i32 = arith.constant 5 : i32
    %193 = arith.addi %3, %c5_i32 : i32
    %c1_i32_40 = arith.constant 1 : i32
    %194 = arith.cmpi slt, %193, %c1_i32_40 : i32
    %195 = arith.select %194, %192, %163 : vector<1x128xf32>
    %c6 = arith.constant 6 : index
    %c0_41 = arith.constant 0 : index
    %196 = vector.load %arg1[%c6, %c0_41] : memref<8x384xf32, #tpu.memory_space<vmem>>, vector<1x384xf32>
    %cst_42 = arith.constant dense<0.000000e+00> : vector<1x384xf32>
    %197 = tpu.matmul %195, %5, %cst_42 {dimension_numbers = #tpu.dot_dimension_numbers<[1], [0], [0], [1], [0, 0, 1, 1], [], []>} : vector<1x128xf32>, vector<128x384xf32>, vector<1x384xf32> -> vector<1x384xf32>
    %198 = vector.extract_strided_slice %196 {offsets = [0, 0], sizes = [1, 128], strides = [1, 1]} : vector<1x384xf32> to vector<1x128xf32>
    %199 = vector.extract_strided_slice %197 {offsets = [0, 0], sizes = [1, 128], strides = [1, 1]} : vector<1x384xf32> to vector<1x128xf32>
    %200 = arith.addf %198, %199 : vector<1x128xf32>
    %201 = arith.negf %200 : vector<1x128xf32>
    %202 = math.exp %201 : vector<1x128xf32>
    %cst_43 = arith.constant 1.000000e+00 : f32
    %203 = vector.broadcast %cst_43 : f32 to vector<1x128xf32>
    %204 = arith.addf %203, %202 : vector<1x128xf32>
    %205 = arith.divf %203, %204 : vector<1x128xf32>
    %206 = vector.extract_strided_slice %196 {offsets = [0, 128], sizes = [1, 128], strides = [1, 1]} : vector<1x384xf32> to vector<1x128xf32>
    %207 = vector.extract_strided_slice %197 {offsets = [0, 128], sizes = [1, 128], strides = [1, 1]} : vector<1x384xf32> to vector<1x128xf32>
    %208 = arith.addf %206, %207 : vector<1x128xf32>
    %209 = arith.negf %208 : vector<1x128xf32>
    %210 = math.exp %209 : vector<1x128xf32>
    %cst_44 = arith.constant 1.000000e+00 : f32
    %211 = vector.broadcast %cst_44 : f32 to vector<1x128xf32>
    %212 = arith.addf %211, %210 : vector<1x128xf32>
    %213 = arith.divf %211, %212 : vector<1x128xf32>
    %214 = vector.extract_strided_slice %196 {offsets = [0, 256], sizes = [1, 128], strides = [1, 1]} : vector<1x384xf32> to vector<1x128xf32>
    %215 = vector.extract_strided_slice %197 {offsets = [0, 256], sizes = [1, 128], strides = [1, 1]} : vector<1x384xf32> to vector<1x128xf32>
    %216 = arith.addf %215, %6 : vector<1x128xf32>
    %217 = arith.mulf %205, %216 : vector<1x128xf32>
    %218 = arith.addf %214, %217 : vector<1x128xf32>
    %219 = math.tanh %218 : vector<1x128xf32>
    %cst_45 = arith.constant 1.000000e+00 : f32
    %220 = vector.broadcast %cst_45 : f32 to vector<1x128xf32>
    %221 = arith.subf %220, %213 : vector<1x128xf32>
    %222 = arith.mulf %221, %219 : vector<1x128xf32>
    %223 = arith.mulf %213, %195 : vector<1x128xf32>
    %224 = arith.addf %222, %223 : vector<1x128xf32>
    %c6_i32 = arith.constant 6 : i32
    %225 = arith.addi %3, %c6_i32 : i32
    %c1_i32_46 = arith.constant 1 : i32
    %226 = arith.cmpi slt, %225, %c1_i32_46 : i32
    %227 = arith.select %226, %224, %195 : vector<1x128xf32>
    %c7 = arith.constant 7 : index
    %c0_47 = arith.constant 0 : index
    %228 = vector.load %arg1[%c7, %c0_47] : memref<8x384xf32, #tpu.memory_space<vmem>>, vector<1x384xf32>
    %cst_48 = arith.constant dense<0.000000e+00> : vector<1x384xf32>
    %229 = tpu.matmul %227, %5, %cst_48 {dimension_numbers = #tpu.dot_dimension_numbers<[1], [0], [0], [1], [0, 0, 1, 1], [], []>} : vector<1x128xf32>, vector<128x384xf32>, vector<1x384xf32> -> vector<1x384xf32>
    %230 = vector.extract_strided_slice %228 {offsets = [0, 0], sizes = [1, 128], strides = [1, 1]} : vector<1x384xf32> to vector<1x128xf32>
    %231 = vector.extract_strided_slice %229 {offsets = [0, 0], sizes = [1, 128], strides = [1, 1]} : vector<1x384xf32> to vector<1x128xf32>
    %232 = arith.addf %230, %231 : vector<1x128xf32>
    %233 = arith.negf %232 : vector<1x128xf32>
    %234 = math.exp %233 : vector<1x128xf32>
    %cst_49 = arith.constant 1.000000e+00 : f32
    %235 = vector.broadcast %cst_49 : f32 to vector<1x128xf32>
    %236 = arith.addf %235, %234 : vector<1x128xf32>
    %237 = arith.divf %235, %236 : vector<1x128xf32>
    %238 = vector.extract_strided_slice %228 {offsets = [0, 128], sizes = [1, 128], strides = [1, 1]} : vector<1x384xf32> to vector<1x128xf32>
    %239 = vector.extract_strided_slice %229 {offsets = [0, 128], sizes = [1, 128], strides = [1, 1]} : vector<1x384xf32> to vector<1x128xf32>
    %240 = arith.addf %238, %239 : vector<1x128xf32>
    %241 = arith.negf %240 : vector<1x128xf32>
    %242 = math.exp %241 : vector<1x128xf32>
    %cst_50 = arith.constant 1.000000e+00 : f32
    %243 = vector.broadcast %cst_50 : f32 to vector<1x128xf32>
    %244 = arith.addf %243, %242 : vector<1x128xf32>
    %245 = arith.divf %243, %244 : vector<1x128xf32>
    %246 = vector.extract_strided_slice %228 {offsets = [0, 256], sizes = [1, 128], strides = [1, 1]} : vector<1x384xf32> to vector<1x128xf32>
    %247 = vector.extract_strided_slice %229 {offsets = [0, 256], sizes = [1, 128], strides = [1, 1]} : vector<1x384xf32> to vector<1x128xf32>
    %248 = arith.addf %247, %6 : vector<1x128xf32>
    %249 = arith.mulf %237, %248 : vector<1x128xf32>
    %250 = arith.addf %246, %249 : vector<1x128xf32>
    %251 = math.tanh %250 : vector<1x128xf32>
    %cst_51 = arith.constant 1.000000e+00 : f32
    %252 = vector.broadcast %cst_51 : f32 to vector<1x128xf32>
    %253 = arith.subf %252, %245 : vector<1x128xf32>
    %254 = arith.mulf %253, %251 : vector<1x128xf32>
    %255 = arith.mulf %245, %227 : vector<1x128xf32>
    %256 = arith.addf %254, %255 : vector<1x128xf32>
    %c7_i32 = arith.constant 7 : i32
    %257 = arith.addi %3, %c7_i32 : i32
    %c1_i32_52 = arith.constant 1 : i32
    %258 = arith.cmpi slt, %257, %c1_i32_52 : i32
    %259 = arith.select %258, %256, %227 : vector<1x128xf32>
    %260 = tpu.concatenate %35, %67, %99, %131, %163, %195, %227, %259 in 0 : vector<1x128xf32>, vector<1x128xf32>, vector<1x128xf32>, vector<1x128xf32>, vector<1x128xf32>, vector<1x128xf32>, vector<1x128xf32>, vector<1x128xf32> -> vector<8x128xf32>
    %c0_53 = arith.constant 0 : index
    %c0_54 = arith.constant 0 : index
    %261 = vector.load %arg5[%c0_53, %c0_54] : memref<8x128xf32, #tpu.memory_space<vmem>>, vector<8x128xf32>
    tpu.vector_store %arg5[%c0_53, %c0_54], %260 {strides = array<i32>} : memref<8x128xf32, #tpu.memory_space<vmem>>, vector<8x128xf32>,
    %c0_55 = arith.constant 0 : index
    %c0_56 = arith.constant 0 : index
    %262 = vector.load %arg6[%c0_55, %c0_56] : memref<1x128xf32, #tpu.memory_space<vmem>>, vector<1x128xf32>
    tpu.vector_store %arg6[%c0_55, %c0_56], %259 {strides = array<i32>} : memref<1x128xf32, #tpu.memory_space<vmem>>, vector<1x128xf32>,
    return
  }
  func.func @transform_0(%arg0: i32) -> (i32, i32) {
    %c0_i32 = arith.constant 0 : i32
    %c0_i32_0 = arith.constant 0 : i32
    return %arg0, %c0_i32 : i32, i32
  }
  func.func @transform_1(%arg0: i32) -> (i32, i32) {
    %c0_i32 = arith.constant 0 : i32
    %c0_i32_0 = arith.constant 0 : i32
    %c0_i32_1 = arith.constant 0 : i32
    return %c0_i32, %c0_i32_0 : i32, i32
  }
  func.func @transform_2(%arg0: i32) -> (i32, i32) {
    %c0_i32 = arith.constant 0 : i32
    %c0_i32_0 = arith.constant 0 : i32
    %c0_i32_1 = arith.constant 0 : i32
    return %c0_i32, %c0_i32_0 : i32, i32
  }
  func.func @transform_3(%arg0: i32) -> (i32, i32) {
    %c0_i32 = arith.constant 0 : i32
    %c0_i32_0 = arith.constant 0 : i32
    %c0_i32_1 = arith.constant 0 : i32
    return %c0_i32, %c0_i32_0 : i32, i32
  }
  func.func @transform_4(%arg0: i32) -> (i32, i32) {
    %c0_i32 = arith.constant 0 : i32
    %c0_i32_0 = arith.constant 0 : i32
    return %arg0, %c0_i32 : i32, i32
  }
}

</mosaic_0001>

<llo_original>
// kernel: tpu_custom_call.1
$region0: #{tpu_custom_call.1}
  #allocation0 [shape = 'u32[]', space=smem, size = 0x4, offset = 0x4, fixed_abs, tag = 'smem constant byte address 0x4 - core index']
  #allocation1 [shape = 'u32[144,128]{1,0:T(1,128)}', space=vmem, size = 0x12000, scoped, tag = 'internal scratch']
  #allocation2 [shape = 'f32[1,128]{1,0:T(1,128)}', space=vmem, size = 0x200, scoped, tag = 'scratch operand']
  %s0 = inlined_call_operand.hbm [shape: f32[8,384], index: 0, kind: input, shape index: {}]
  %s1 = inlined_call_operand.vmem [shape: f32[1,128], index: 1, kind: input, shape index: {}]
  %s2 = inlined_call_operand.hbm [shape: f32[128,384], index: 2, kind: input, shape index: {}]
  %s3 = inlined_call_operand.vmem [shape: f32[1,128], index: 3, kind: input, shape index: {}]
  %s4 = inlined_call_operand.hbm [shape: f32[8,128], index: 4, kind: output, shape index: {}]
  %s5 = sld [smem:[#allocation0]]
  $region38: #{tpu_custom_call.1} parent=0
    _
  %s7 = ssub.s32 1, %s5
  %s8 = scalar_select 0, %s7, %s5
  $region1: #{tpu_custom_call.1} parent=0
    #allocation3 [shape = 'u8[12288]{0}', space=vmem, size = 0x3000, scoped, tag = 'input window, operand 0, single buffered']
    #allocation4 [shape = 's32[1]{0}', space=sflag, size = 0x4, scoped, tag = 'scoped memory for tpu_custom_call.1']
    #allocation5 [shape = 's32[1]{0}', space=sflag, size = 0x4, scoped, tag = 'scoped memory for tpu_custom_call.1']
    #allocation6 [shape = 'u8[196608]{0}', space=vmem, size = 0x30000, scoped, tag = 'input window, operand 2, single buffered']
    #allocation7 [shape = 's32[1]{0}', space=sflag, size = 0x4, scoped, tag = 'scoped memory for tpu_custom_call.1']
    #allocation8 [shape = 'u8[4096]{0}', space=vmem, size = 0x1000, scoped, tag = 'output window, operand 0, single buffered']
    %9 = vsyncpa [#allocation4], 0
    %10 = vsyncpa [#allocation7], 0
    %11 = vsyncpa [#allocation5], 0
    // Predicated region
    $region2: #{tpu_custom_call.1} parent=1 // pred_check
      _
    $region3: #{tpu_custom_call.1} parent=1 // pred_check_branch
      %13 = sbr.rel (0) target = $region5
    $region4: #{tpu_custom_call.1} parent=1 // pred_region
      %s15 = ssub.s32 384, 384
      %16 = vsyncadd [#allocation4], %s15
      %s18 = sshll.u32 [#allocation3], 4
      %s19 = int_to_ptr.vmem [resolvable:$true] %s18
      %21 = dma.hbm_to_vmem [thread:$0]  %s0, 384, %s19, [#allocation4]
    $region5: #{tpu_custom_call.1} parent=1 // pred_fallthru
      _
    // Predicated region
    $region6: #{tpu_custom_call.1} parent=1 // pred_check
      _
    $region7: #{tpu_custom_call.1} parent=1 // pred_check_branch
      %23 = sbr.rel (0) target = $region9
    $region8: #{tpu_custom_call.1} parent=1 // pred_region
      _
    $region9: #{tpu_custom_call.1} parent=1 // pred_fallthru
      _
    // Predicated region
    $region10: #{tpu_custom_call.1} parent=1 // pred_check
      _
    $region11: #{tpu_custom_call.1} parent=1 // pred_check_branch
      %25 = sbr.rel (0) target = $region13
    $region12: #{tpu_custom_call.1} parent=1 // pred_region
      %s27 = ssub.s32 6144, 6144
      %28 = vsyncadd [#allocation7], %s27
      %s29 = sshll.u32 [#allocation6], 4
      %s30 = int_to_ptr.vmem [resolvable:$true] %s29
      %35 = dma.hbm_to_vmem [thread:$0]  %s2, 6144, %s30, [#allocation7], 384, 384, 24
    $region13: #{tpu_custom_call.1} parent=1 // pred_fallthru
      _
    // Predicated region
    $region14: #{tpu_custom_call.1} parent=1 // pred_check
      _
    $region15: #{tpu_custom_call.1} parent=1 // pred_check_branch
      %37 = sbr.rel (0) target = $region17
    $region16: #{tpu_custom_call.1} parent=1 // pred_region
      _
    $region17: #{tpu_custom_call.1} parent=1 // pred_fallthru
      _
    // Predicated region
    $region18: #{tpu_custom_call.1} parent=1 // pred_check
      _
    $region19: #{tpu_custom_call.1} parent=1 // pred_check_branch
      %39 = sbr.rel (0) target = $region21
    $region20: #{tpu_custom_call.1} parent=1 // pred_region
      %40 = dma.done [#allocation4], 384
    $region21: #{tpu_custom_call.1} parent=1 // pred_fallthru
      _
    // Predicated region
    $region22: #{tpu_custom_call.1} parent=1 // pred_check
      _
    $region23: #{tpu_custom_call.1} parent=1 // pred_check_branch
      %42 = sbr.rel (0) target = $region25
    $region24: #{tpu_custom_call.1} parent=1 // pred_region
      %43 = dma.done [#allocation7], 6144
    $region25: #{tpu_custom_call.1} parent=1 // pred_fallthru
      _
    %p44 = scmp.eq.s32.totalorder 0, 0
    // Predicated region
    $region26: #{tpu_custom_call.1} parent=1 // pred_check
      %p45 = pneg %p44
    $region27: #{tpu_custom_call.1} parent=1 // pred_check_branch
      %47 = sbr.rel (%p45) target = $region29
    $region28: #{tpu_custom_call.1} parent=1 // pred_region
      %v48 = vld [vmem:[%s1] sm:$0x1]
      %49 = vst [vmem:[#allocation2] sm:$0x1] %v48
    $region29: #{tpu_custom_call.1} parent=1 // pred_fallthru
      _
    %s50 = smul.u32 0, 8
    %v51 = vld [vmem:[#allocation2] sm:$0x1]
    %v52 = vld [vmem:[#allocation6] sm:$0xff]
    %v53 = vld [vmem:[#allocation6 + $0x8] sm:$0xff]
    %v54 = vld [vmem:[#allocation6 + $0x10] sm:$0xff]
    %v55 = vld [vmem:[#allocation6 + $0x18] sm:$0xff]
    %v56 = vld [vmem:[#allocation6 + $0x20] sm:$0xff]
    %v57 = vld [vmem:[#allocation6 + $0x28] sm:$0xff]
    %v58 = vld [vmem:[#allocation6 + $0x30] sm:$0xff]
    %v59 = vld [vmem:[#allocation6 + $0x38] sm:$0xff]
    %v60 = vld [vmem:[#allocation6 + $0x40] sm:$0xff]
    %v61 = vld [vmem:[#allocation6 + $0x48] sm:$0xff]
    %v62 = vld [vmem:[#allocation6 + $0x50] sm:$0xff]
    %v63 = vld [vmem:[#allocation6 + $0x58] sm:$0xff]
    %v64 = vld [vmem:[#allocation6 + $0x60] sm:$0xff]
    %v65 = vld [vmem:[#allocation6 + $0x68] sm:$0xff]
    %v66 = vld [vmem:[#allocation6 + $0x70] sm:$0xff]
    %v67 = vld [vmem:[#allocation6 + $0x78] sm:$0xff]
    %v68 = vld [vmem:[#allocation6 + $0x80] sm:$0xff]
    %v69 = vld [vmem:[#allocation6 + $0x88] sm:$0xff]
    %v70 = vld [vmem:[#allocation6 + $0x90] sm:$0xff]
    %v71 = vld [vmem:[#allocation6 + $0x98] sm:$0xff]
    %v72 = vld [vmem:[#allocation6 + $0xa0] sm:$0xff]
    %v73 = vld [vmem:[#allocation6 + $0xa8] sm:$0xff]
    %v74 = vld [vmem:[#allocation6 + $0xb0] sm:$0xff]
    %v75 = vld [vmem:[#allocation6 + $0xb8] sm:$0xff]
    %v76 = vld [vmem:[#allocation6 + $0xc0] sm:$0xff]
    %v77 = vld [vmem:[#allocation6 + $0xc8] sm:$0xff]
    %v78 = vld [vmem:[#allocation6 + $0xd0] sm:$0xff]
    %v79 = vld [vmem:[#allocation6 + $0xd8] sm:$0xff]
    %v80 = vld [vmem:[#allocation6 + $0xe0] sm:$0xff]
    %v81 = vld [vmem:[#allocation6 + $0xe8] sm:$0xff]
    %v82 = vld [vmem:[#allocation6 + $0xf0] sm:$0xff]
    %v83 = vld [vmem:[#allocation6 + $0xf8] sm:$0xff]
    %v84 = vld [vmem:[#allocation6 + $0x100] sm:$0xff]
    %v85 = vld [vmem:[#allocation6 + $0x108] sm:$0xff]
    %v86 = vld [vmem:[#allocation6 + $0x110] sm:$0xff]
    %v87 = vld [vmem:[#allocation6 + $0x118] sm:$0xff]
    %v88 = vld [vmem:[#allocation6 + $0x120] sm:$0xff]
    %v89 = vld [vmem:[#allocation6 + $0x128] sm:$0xff]
    %v90 = vld [vmem:[#allocation6 + $0x130] sm:$0xff]
    %v91 = vld [vmem:[#allocation6 + $0x138] sm:$0xff]
    %v92 = vld [vmem:[#allocation6 + $0x140] sm:$0xff]
    %v93 = vld [vmem:[#allocation6 + $0x148] sm:$0xff]
    %v94 = vld [vmem:[#allocation6 + $0x150] sm:$0xff]
    %v95 = vld [vmem:[#allocation6 + $0x158] sm:$0xff]
    %v96 = vld [vmem:[#allocation6 + $0x160] sm:$0xff]
    %v97 = vld [vmem:[#allocation6 + $0x168] sm:$0xff]
    %v98 = vld [vmem:[#allocation6 + $0x170] sm:$0xff]
    %v99 = vld [vmem:[#allocation6 + $0x178] sm:$0xff]
    %v100 = vld [vmem:[%s3] sm:$0x1]
    %v101 = vld [vmem:[#allocation3] ss:$8 sm:$0x7]
    %102 = vmatprep.subr.mxu0 %v53
    %103 = vmatpush1.msra.mxu0 %v52
    %104 = vmatprep.subr.mxu0 %v56
    %105 = vmatpush1.msra.mxu0 %v55
    %106 = vmatprep.subr.mxu0 %v59
    %107 = vmatpush1.msra.mxu0 %v58
    %108 = vmatprep.subr.mxu0 %v62
    %109 = vmatpush1.msra.mxu0 %v61
    %110 = vmatprep.subr.mxu0 %v65
    %111 = vmatpush1.msra.mxu0 %v64
    %112 = vmatprep.subr.mxu0 %v68
    %113 = vmatpush1.msra.mxu0 %v67
    %114 = vmatprep.subr.mxu0 %v71
    %115 = vmatpush1.msra.mxu0 %v70
    %116 = vmatprep.subr.mxu0 %v74
    %117 = vmatpush1.msra.mxu0 %v73
    %118 = vmatprep.subr.mxu0 %v77
    %119 = vmatpush1.msra.mxu0 %v76
    %120 = vmatprep.subr.mxu0 %v80
    %121 = vmatpush1.msra.mxu0 %v79
    %122 = vmatprep.subr.mxu0 %v83
    %123 = vmatpush1.msra.mxu0 %v82
    %124 = vmatprep.subr.mxu0 %v86
    %125 = vmatpush1.msra.mxu0 %v85
    %126 = vmatprep.subr.mxu0 %v89
    %127 = vmatpush1.msra.mxu0 %v88
    %128 = vmatprep.subr.mxu0 %v92
    %129 = vmatpush1.msra.mxu0 %v91
    %130 = vmatprep.subr.mxu0 %v95
    %131 = vmatpush1.msra.mxu0 %v94
    %132 = vmatprep.subr.mxu0 %v98
    %133 = vmatpush1.msra.mxu0 %v97
    %134 = vmatprep.subr.mxu0 0.0
    %135 = vmatpush1.msra.mxu0 0.0
    %136 = vmatprep.subr.mxu0 0.0
    %137 = vmatpush1.msra.mxu0 0.0
    %138 = vmatprep.subr.mxu0 0.0
    %139 = vmatpush1.msra.mxu0 0.0
    %140 = vmatprep.subr.mxu0 0.0
    %141 = vmatpush1.msra.mxu0 0.0
    %142 = vmatprep.subr.mxu0 0.0
    %143 = vmatpush1.msra.mxu0 0.0
    %144 = vmatprep.subr.mxu0 0.0
    %145 = vmatpush1.msra.mxu0 0.0
    %146 = vmatprep.subr.mxu0 0.0
    %147 = vmatpush1.msra.mxu0 0.0
    %148 = vmatprep.subr.mxu0 0.0
    %149 = vmatpush1.msra.mxu0 0.0
    %150 = vmatprep.subr.mxu0 0.0
    %151 = vmatpush1.msra.mxu0 0.0
    %152 = vmatprep.subr.mxu0 0.0
    %153 = vmatpush1.msra.mxu0 0.0
    %154 = vmatprep.subr.mxu0 0.0
    %155 = vmatpush1.msra.mxu0 0.0
    %156 = vmatprep.subr.mxu0 0.0
    %157 = vmatpush1.msra.mxu0 0.0
    %158 = vmatprep.subr.mxu0 0.0
    %159 = vmatpush1.msra.mxu0 0.0
    %160 = vmatprep.subr.mxu0 0.0
    %161 = vmatpush1.msra.mxu0 0.0
    %162 = vmatprep.subr.mxu0 0.0
    %163 = vmatpush1.msra.mxu0 0.0
    %164 = vmatprep.subr.mxu0 0.0
    %165 = vmatpush1.msra.mxu0 0.0
    %166 = vmatprep.mubr.f32.mxu0 0.0
    %167 = vmatmul.mubr.f32.gmra.mrb[0].mxu0 %v51
    %v168 = vpop.f32.mrb[0].mxu0
    %v169 = vadd.f32 0.0, %v168
    %v170 = vpop.f32.mrb[0].mxu0
    %v171 = vadd.f32 0.0, %v170
    %172 = vdwg.mxu0
    %173 = vmatprep.subr.mxu0 0.0
    %174 = vmatpush1.msra.mxu0 %v54
    %175 = vmatprep.subr.mxu0 0.0
    %176 = vmatpush1.msra.mxu0 %v57
    %177 = vmatprep.subr.mxu0 0.0
    %178 = vmatpush1.msra.mxu0 %v60
    %179 = vmatprep.subr.mxu0 0.0
    %180 = vmatpush1.msra.mxu0 %v63
    %181 = vmatprep.subr.mxu0 0.0
    %182 = vmatpush1.msra.mxu0 %v66
    %183 = vmatprep.subr.mxu0 0.0
    %184 = vmatpush1.msra.mxu0 %v69
    %185 = vmatprep.subr.mxu0 0.0
    %186 = vmatpush1.msra.mxu0 %v72
    %187 = vmatprep.subr.mxu0 0.0
    %188 = vmatpush1.msra.mxu0 %v75
    %189 = vmatprep.subr.mxu0 0.0
    %190 = vmatpush1.msra.mxu0 %v78
    %191 = vmatprep.subr.mxu0 0.0
    %192 = vmatpush1.msra.mxu0 %v81
    %193 = vmatprep.subr.mxu0 0.0
    %194 = vmatpush1.msra.mxu0 %v84
    %195 = vmatprep.subr.mxu0 0.0
    %196 = vmatpush1.msra.mxu0 %v87
    %197 = vmatprep.subr.mxu0 0.0
    %198 = vmatpush1.msra.mxu0 %v90
    %199 = vmatprep.subr.mxu0 0.0
    %200 = vmatpush1.msra.mxu0 %v93
    %201 = vmatprep.subr.mxu0 0.0
    %202 = vmatpush1.msra.mxu0 %v96
    %203 = vmatprep.subr.mxu0 0.0
    %204 = vmatpush1.msra.mxu0 %v99
    %205 = vmatprep.subr.mxu0 0.0
    %206 = vmatpush1.msra.mxu0 0.0
    %207 = vmatprep.subr.mxu0 0.0
    %208 = vmatpush1.msra.mxu0 0.0
    %209 = vmatprep.subr.mxu0 0.0
    %210 = vmatpush1.msra.mxu0 0.0
    %211 = vmatprep.subr.mxu0 0.0
    %212 = vmatpush1.msra.mxu0 0.0
    %213 = vmatprep.subr.mxu0 0.0
    %214 = vmatpush1.msra.mxu0 0.0
    %215 = vmatprep.subr.mxu0 0.0
    %216 = vmatpush1.msra.mxu0 0.0
    %217 = vmatprep.subr.mxu0 0.0
    %218 = vmatpush1.msra.mxu0 0.0
    %219 = vmatprep.subr.mxu0 0.0
    %220 = vmatpush1.msra.mxu0 0.0
    %221 = vmatprep.subr.mxu0 0.0
    %222 = vmatpush1.msra.mxu0 0.0
    %223 = vmatprep.subr.mxu0 0.0
    %224 = vmatpush1.msra.mxu0 0.0
    %225 = vmatprep.subr.mxu0 0.0
    %226 = vmatpush1.msra.mxu0 0.0
    %227 = vmatprep.subr.mxu0 0.0
    %228 = vmatpush1.msra.mxu0 0.0
    %229 = vmatprep.subr.mxu0 0.0
    %230 = vmatpush1.msra.mxu0 0.0
    %231 = vmatprep.subr.mxu0 0.0
    %232 = vmatpush1.msra.mxu0 0.0
    %233 = vmatprep.subr.mxu0 0.0
    %234 = vmatpush1.msra.mxu0 0.0
    %235 = vmatprep.subr.mxu0 0.0
    %236 = vmatpush1.msra.mxu0 0.0
    %237 = vmatprep.mubr.f32.mxu0 0.0
    %238 = vmatmul.mubr.f32.gmra.mrb[0].mxu0 %v51
    %v239 = vpop.f32.mrb[0].mxu0
    %v240 = vadd.f32 0.0, %v239
    %v241 = vpop.f32.mrb[0].mxu0
    %242 = vdwg.mxu0
    %v243 = vadd.f32 %v101, %v169
    %v244 = vxor.u32 %v243, 2147483648
    %v245 = vmul.f32 %v244, 1.442695
    %v246 = vpow.pop %v245
    %v247 = vadd.f32 %v246, 1.0
    %v248 = vrcp.pop %v247
    %v249 = vmul.f32 1.0, %v248
    %v251 = vrot.slane %v101, 1
    %v253 = vadd.f32 %v251, %v171
    %v254 = vxor.u32 %v253, 2147483648
    %v255 = vmul.f32 %v254, 1.442695
    %v256 = vpow.pop %v255
    %v257 = vadd.f32 %v256, 1.0
    %v258 = vrcp.pop %v257
    %v259 = vmul.f32 1.0, %v258
    %v260 = vadd.f32 %v240, %v100
    %v261 = vmul.f32 %v249, %v260
    %v262 = vrot.slane %v101, 2
    %v264 = vadd.f32 %v262, %v261
    %v265 = vtanh.pop %v264
    %v266 = vsub.f32 1.0, %v259
    %v267 = vmul.f32 %v266, %v265
    %v268 = vmul.f32 %v259, %v51
    %v269 = vadd.f32 %v267, %v268
    %s270 = scalar_lea.vmem [#allocation3], 1
    %v271 = vld [vmem:[%s270] ss:$8 sm:$0x7]
    %272 = vmatprep.subr.mxu0 %v53
    %273 = vmatpush1.msra.mxu0 %v52
    %274 = vmatprep.subr.mxu0 %v56
    %275 = vmatpush1.msra.mxu0 %v55
    %276 = vmatprep.subr.mxu0 %v59
    %277 = vmatpush1.msra.mxu0 %v58
    %278 = vmatprep.subr.mxu0 %v62
    %279 = vmatpush1.msra.mxu0 %v61
    %280 = vmatprep.subr.mxu0 %v65
    %281 = vmatpush1.msra.mxu0 %v64
    %282 = vmatprep.subr.mxu0 %v68
    %283 = vmatpush1.msra.mxu0 %v67
    %284 = vmatprep.subr.mxu0 %v71
    %285 = vmatpush1.msra.mxu0 %v70
    %286 = vmatprep.subr.mxu0 %v74
    %287 = vmatpush1.msra.mxu0 %v73
    %288 = vmatprep.subr.mxu0 %v77
    %289 = vmatpush1.msra.mxu0 %v76
    %290 = vmatprep.subr.mxu0 %v80
    %291 = vmatpush1.msra.mxu0 %v79
    %292 = vmatprep.subr.mxu0 %v83
    %293 = vmatpush1.msra.mxu0 %v82
    %294 = vmatprep.subr.mxu0 %v86
    %295 = vmatpush1.msra.mxu0 %v85
    %296 = vmatprep.subr.mxu0 %v89
    %297 = vmatpush1.msra.mxu0 %v88
    %298 = vmatprep.subr.mxu0 %v92
    %299 = vmatpush1.msra.mxu0 %v91
    %300 = vmatprep.subr.mxu0 %v95
    %301 = vmatpush1.msra.mxu0 %v94
    %302 = vmatprep.subr.mxu0 %v98
    %303 = vmatpush1.msra.mxu0 %v97
    %304 = vmatprep.subr.mxu0 0.0
    %305 = vmatpush1.msra.mxu0 0.0
    %306 = vmatprep.subr.mxu0 0.0
    %307 = vmatpush1.msra.mxu0 0.0
    %308 = vmatprep.subr.mxu0 0.0
    %309 = vmatpush1.msra.mxu0 0.0
    %310 = vmatprep.subr.mxu0 0.0
    %311 = vmatpush1.msra.mxu0 0.0
    %312 = vmatprep.subr.mxu0 0.0
    %313 = vmatpush1.msra.mxu0 0.0
    %314 = vmatprep.subr.mxu0 0.0
    %315 = vmatpush1.msra.mxu0 0.0
    %316 = vmatprep.subr.mxu0 0.0
    %317 = vmatpush1.msra.mxu0 0.0
    %318 = vmatprep.subr.mxu0 0.0
    %319 = vmatpush1.msra.mxu0 0.0
    %320 = vmatprep.subr.mxu0 0.0
    %321 = vmatpush1.msra.mxu0 0.0
    %322 = vmatprep.subr.mxu0 0.0
    %323 = vmatpush1.msra.mxu0 0.0
    %324 = vmatprep.subr.mxu0 0.0
    %325 = vmatpush1.msra.mxu0 0.0
    %326 = vmatprep.subr.mxu0 0.0
    %327 = vmatpush1.msra.mxu0 0.0
    %328 = vmatprep.subr.mxu0 0.0
    %329 = vmatpush1.msra.mxu0 0.0
    %330 = vmatprep.subr.mxu0 0.0
    %331 = vmatpush1.msra.mxu0 0.0
    %332 = vmatprep.subr.mxu0 0.0
    %333 = vmatpush1.msra.mxu0 0.0
    %334 = vmatprep.subr.mxu0 0.0
    %335 = vmatpush1.msra.mxu0 0.0
    %336 = vmatprep.mubr.f32.mxu0 0.0
    %337 = vmatmul.mubr.f32.gmra.mrb[0].mxu0 %v269
    %v338 = vpop.f32.mrb[0].mxu0
    %v339 = vadd.f32 0.0, %v338
    %v340 = vpop.f32.mrb[0].mxu0
    %v341 = vadd.f32 0.0, %v340
    %342 = vdwg.mxu0
    %343 = vmatprep.subr.mxu0 0.0
    %344 = vmatpush1.msra.mxu0 %v54
    %345 = vmatprep.subr.mxu0 0.0
    %346 = vmatpush1.msra.mxu0 %v57
    %347 = vmatprep.subr.mxu0 0.0
    %348 = vmatpush1.msra.mxu0 %v60
    %349 = vmatprep.subr.mxu0 0.0
    %350 = vmatpush1.msra.mxu0 %v63
    %351 = vmatprep.subr.mxu0 0.0
    %352 = vmatpush1.msra.mxu0 %v66
    %353 = vmatprep.subr.mxu0 0.0
    %354 = vmatpush1.msra.mxu0 %v69
    %355 = vmatprep.subr.mxu0 0.0
    %356 = vmatpush1.msra.mxu0 %v72
    %357 = vmatprep.subr.mxu0 0.0
    %358 = vmatpush1.msra.mxu0 %v75
    %359 = vmatprep.subr.mxu0 0.0
    %360 = vmatpush1.msra.mxu0 %v78
    %361 = vmatprep.subr.mxu0 0.0
    %362 = vmatpush1.msra.mxu0 %v81
    %363 = vmatprep.subr.mxu0 0.0
    %364 = vmatpush1.msra.mxu0 %v84
    %365 = vmatprep.subr.mxu0 0.0
    %366 = vmatpush1.msra.mxu0 %v87
    %367 = vmatprep.subr.mxu0 0.0
    %368 = vmatpush1.msra.mxu0 %v90
    %369 = vmatprep.subr.mxu0 0.0
    %370 = vmatpush1.msra.mxu0 %v93
    %371 = vmatprep.subr.mxu0 0.0
    %372 = vmatpush1.msra.mxu0 %v96
    %373 = vmatprep.subr.mxu0 0.0
    %374 = vmatpush1.msra.mxu0 %v99
    %375 = vmatprep.subr.mxu0 0.0
    %376 = vmatpush1.msra.mxu0 0.0
    %377 = vmatprep.subr.mxu0 0.0
    %378 = vmatpush1.msra.mxu0 0.0
    %379 = vmatprep.subr.mxu0 0.0
    %380 = vmatpush1.msra.mxu0 0.0
    %381 = vmatprep.subr.mxu0 0.0
    %382 = vmatpush1.msra.mxu0 0.0
    %383 = vmatprep.subr.mxu0 0.0
    %384 = vmatpush1.msra.mxu0 0.0
    %385 = vmatprep.subr.mxu0 0.0
    %386 = vmatpush1.msra.mxu0 0.0
    %387 = vmatprep.subr.mxu0 0.0
    %388 = vmatpush1.msra.mxu0 0.0
    %389 = vmatprep.subr.mxu0 0.0
    %390 = vmatpush1.msra.mxu0 0.0
    %391 = vmatprep.subr.mxu0 0.0
    %392 = vmatpush1.msra.mxu0 0.0
    %393 = vmatprep.subr.mxu0 0.0
    %394 = vmatpush1.msra.mxu0 0.0
    %395 = vmatprep.subr.mxu0 0.0
    %396 = vmatpush1.msra.mxu0 0.0
    %397 = vmatprep.subr.mxu0 0.0
    %398 = vmatpush1.msra.mxu0 0.0
    %399 = vmatprep.subr.mxu0 0.0
    %400 = vmatpush1.msra.mxu0 0.0
    %401 = vmatprep.subr.mxu0 0.0
    %402 = vmatpush1.msra.mxu0 0.0
    %403 = vmatprep.subr.mxu0 0.0
    %404 = vmatpush1.msra.mxu0 0.0
    %405 = vmatprep.subr.mxu0 0.0
    %406 = vmatpush1.msra.mxu0 0.0
    %407 = vmatprep.mubr.f32.mxu0 0.0
    %408 = vmatmul.mubr.f32.gmra.mrb[0].mxu0 %v269
    %v409 = vpop.f32.mrb[0].mxu0
    %v410 = vadd.f32 0.0, %v409
    %v411 = vpop.f32.mrb[0].mxu0
    %412 = vdwg.mxu0
    %v413 = vadd.f32 %v271, %v339
    %v414 = vxor.u32 %v413, 2147483648
    %v415 = vmul.f32 %v414, 1.442695
    %v416 = vpow.pop %v415
    %v417 = vadd.f32 %v416, 1.0
    %v418 = vrcp.pop %v417
    %v419 = vmul.f32 1.0, %v418
    %v421 = vrot.slane %v271, 1
    %v423 = vadd.f32 %v421, %v341
    %v424 = vxor.u32 %v423, 2147483648
    %v425 = vmul.f32 %v424, 1.442695
    %v426 = vpow.pop %v425
    %v427 = vadd.f32 %v426, 1.0
    %v428 = vrcp.pop %v427
    %v429 = vmul.f32 1.0, %v428
    %v430 = vadd.f32 %v410, %v100
    %v431 = vmul.f32 %v419, %v430
    %v432 = vrot.slane %v271, 2
    %v434 = vadd.f32 %v432, %v431
    %v435 = vtanh.pop %v434
    %v436 = vsub.f32 1.0, %v429
    %v437 = vmul.f32 %v436, %v435
    %v438 = vmul.f32 %v429, %v269
    %v439 = vadd.f32 %v437, %v438
    %s440 = sadd.s32 %s50, 1
    %p441 = scmp.lt.s32.totalorder %s440, 1
    %s442 = scalar_select %p441, 1, 0
    %v443 = vstv %s442
    %vm444 = vcmp.eq.s32.totalorder %v443, 1
    %v445 = vsel %vm444, %v439, %v269
    %s446 = scalar_lea.vmem [#allocation3], 2
    %v447 = vld [vmem:[%s446] ss:$8 sm:$0x7]
    %448 = vmatprep.subr.mxu0 %v53
    %449 = vmatpush1.msra.mxu0 %v52
    %450 = vmatprep.subr.mxu0 %v56
    %451 = vmatpush1.msra.mxu0 %v55
    %452 = vmatprep.subr.mxu0 %v59
    %453 = vmatpush1.msra.mxu0 %v58
    %454 = vmatprep.subr.mxu0 %v62
    %455 = vmatpush1.msra.mxu0 %v61
    %456 = vmatprep.subr.mxu0 %v65
    %457 = vmatpush1.msra.mxu0 %v64
    %458 = vmatprep.subr.mxu0 %v68
    %459 = vmatpush1.msra.mxu0 %v67
    %460 = vmatprep.subr.mxu0 %v71
    %461 = vmatpush1.msra.mxu0 %v70
    %462 = vmatprep.subr.mxu0 %v74
    %463 = vmatpush1.msra.mxu0 %v73
    %464 = vmatprep.subr.mxu0 %v77
    %465 = vmatpush1.msra.mxu0 %v76
    %466 = vmatprep.subr.mxu0 %v80
    %467 = vmatpush1.msra.mxu0 %v79
    %468 = vmatprep.subr.mxu0 %v83
    %469 = vmatpush1.msra.mxu0 %v82
    %470 = vmatprep.subr.mxu0 %v86
    %471 = vmatpush1.msra.mxu0 %v85
    %472 = vmatprep.subr.mxu0 %v89
    %473 = vmatpush1.msra.mxu0 %v88
    %474 = vmatprep.subr.mxu0 %v92
    %475 = vmatpush1.msra.mxu0 %v91
    %476 = vmatprep.subr.mxu0 %v95
    %477 = vmatpush1.msra.mxu0 %v94
    %478 = vmatprep.subr.mxu0 %v98
    %479 = vmatpush1.msra.mxu0 %v97
    %480 = vmatprep.subr.mxu0 0.0
    %481 = vmatpush1.msra.mxu0 0.0
    %482 = vmatprep.subr.mxu0 0.0
    %483 = vmatpush1.msra.mxu0 0.0
    %484 = vmatprep.subr.mxu0 0.0
    %485 = vmatpush1.msra.mxu0 0.0
    %486 = vmatprep.subr.mxu0 0.0
    %487 = vmatpush1.msra.mxu0 0.0
    %488 = vmatprep.subr.mxu0 0.0
    %489 = vmatpush1.msra.mxu0 0.0
    %490 = vmatprep.subr.mxu0 0.0
    %491 = vmatpush1.msra.mxu0 0.0
    %492 = vmatprep.subr.mxu0 0.0
    %493 = vmatpush1.msra.mxu0 0.0
    %494 = vmatprep.subr.mxu0 0.0
    %495 = vmatpush1.msra.mxu0 0.0
    %496 = vmatprep.subr.mxu0 0.0
    %497 = vmatpush1.msra.mxu0 0.0
    %498 = vmatprep.subr.mxu0 0.0
    %499 = vmatpush1.msra.mxu0 0.0
    %500 = vmatprep.subr.mxu0 0.0
    %501 = vmatpush1.msra.mxu0 0.0
    %502 = vmatprep.subr.mxu0 0.0
    %503 = vmatpush1.msra.mxu0 0.0
    %504 = vmatprep.subr.mxu0 0.0
    %505 = vmatpush1.msra.mxu0 0.0
    %506 = vmatprep.subr.mxu0 0.0
    %507 = vmatpush1.msra.mxu0 0.0
    %508 = vmatprep.subr.mxu0 0.0
    %509 = vmatpush1.msra.mxu0 0.0
    %510 = vmatprep.subr.mxu0 0.0
    %511 = vmatpush1.msra.mxu0 0.0
    %512 = vmatprep.mubr.f32.mxu0 0.0
    %513 = vmatmul.mubr.f32.gmra.mrb[0].mxu0 %v445
    %v514 = vpop.f32.mrb[0].mxu0
    %v515 = vadd.f32 0.0, %v514
    %v516 = vpop.f32.mrb[0].mxu0
    %v517 = vadd.f32 0.0, %v516
    %518 = vdwg.mxu0
    %519 = vmatprep.subr.mxu0 0.0
    %520 = vmatpush1.msra.mxu0 %v54
    %521 = vmatprep.subr.mxu0 0.0
    %522 = vmatpush1.msra.mxu0 %v57
    %523 = vmatprep.subr.mxu0 0.0
    %524 = vmatpush1.msra.mxu0 %v60
    %525 = vmatprep.subr.mxu0 0.0
    %526 = vmatpush1.msra.mxu0 %v63
    %527 = vmatprep.subr.mxu0 0.0
    %528 = vmatpush1.msra.mxu0 %v66
    %529 = vmatprep.subr.mxu0 0.0
    %530 = vmatpush1.msra.mxu0 %v69
    %531 = vmatprep.subr.mxu0 0.0
    %532 = vmatpush1.msra.mxu0 %v72
    %533 = vmatprep.subr.mxu0 0.0
    %534 = vmatpush1.msra.mxu0 %v75
    %535 = vmatprep.subr.mxu0 0.0
    %536 = vmatpush1.msra.mxu0 %v78
    %537 = vmatprep.subr.mxu0 0.0
    %538 = vmatpush1.msra.mxu0 %v81
    %539 = vmatprep.subr.mxu0 0.0
    %540 = vmatpush1.msra.mxu0 %v84
    %541 = vmatprep.subr.mxu0 0.0
    %542 = vmatpush1.msra.mxu0 %v87
    %543 = vmatprep.subr.mxu0 0.0
    %544 = vmatpush1.msra.mxu0 %v90
    %545 = vmatprep.subr.mxu0 0.0
    %546 = vmatpush1.msra.mxu0 %v93
    %547 = vmatprep.subr.mxu0 0.0
    %548 = vmatpush1.msra.mxu0 %v96
    %549 = vmatprep.subr.mxu0 0.0
    %550 = vmatpush1.msra.mxu0 %v99
    %551 = vmatprep.subr.mxu0 0.0
    %552 = vmatpush1.msra.mxu0 0.0
    %553 = vmatprep.subr.mxu0 0.0
    %554 = vmatpush1.msra.mxu0 0.0
    %555 = vmatprep.subr.mxu0 0.0
    %556 = vmatpush1.msra.mxu0 0.0
    %557 = vmatprep.subr.mxu0 0.0
    %558 = vmatpush1.msra.mxu0 0.0
    %559 = vmatprep.subr.mxu0 0.0
    %560 = vmatpush1.msra.mxu0 0.0
    %561 = vmatprep.subr.mxu0 0.0
    %562 = vmatpush1.msra.mxu0 0.0
    %563 = vmatprep.subr.mxu0 0.0
    %564 = vmatpush1.msra.mxu0 0.0
    %565 = vmatprep.subr.mxu0 0.0
    %566 = vmatpush1.msra.mxu0 0.0
    %567 = vmatprep.subr.mxu0 0.0
    %568 = vmatpush1.msra.mxu0 0.0
    %569 = vmatprep.subr.mxu0 0.0
    %570 = vmatpush1.msra.mxu0 0.0
    %571 = vmatprep.subr.mxu0 0.0
    %572 = vmatpush1.msra.mxu0 0.0
    %573 = vmatprep.subr.mxu0 0.0
    %574 = vmatpush1.msra.mxu0 0.0
    %575 = vmatprep.subr.mxu0 0.0
    %576 = vmatpush1.msra.mxu0 0.0
    %577 = vmatprep.subr.mxu0 0.0
    %578 = vmatpush1.msra.mxu0 0.0
    %579 = vmatprep.subr.mxu0 0.0
    %580 = vmatpush1.msra.mxu0 0.0
    %581 = vmatprep.subr.mxu0 0.0
    %582 = vmatpush1.msra.mxu0 0.0
    %583 = vmatprep.mubr.f32.mxu0 0.0
    %584 = vmatmul.mubr.f32.gmra.mrb[0].mxu0 %v445
    %v585 = vpop.f32.mrb[0].mxu0
    %v586 = vadd.f32 0.0, %v585
    %v587 = vpop.f32.mrb[0].mxu0
    %588 = vdwg.mxu0
    %v589 = vadd.f32 %v447, %v515
    %v590 = vxor.u32 %v589, 2147483648
    %v591 = vmul.f32 %v590, 1.442695
    %v592 = vpow.pop %v591
    %v593 = vadd.f32 %v592, 1.0
    %v594 = vrcp.pop %v593
    %v595 = vmul.f32 1.0, %v594
    %v597 = vrot.slane %v447, 1
    %v599 = vadd.f32 %v597, %v517
    %v600 = vxor.u32 %v599, 2147483648
    %v601 = vmul.f32 %v600, 1.442695
    %v602 = vpow.pop %v601
    %v603 = vadd.f32 %v602, 1.0
    %v604 = vrcp.pop %v603
    %v605 = vmul.f32 1.0, %v604
    %v606 = vadd.f32 %v586, %v100
    %v607 = vmul.f32 %v595, %v606
    %v608 = vrot.slane %v447, 2
    %v610 = vadd.f32 %v608, %v607
    %v611 = vtanh.pop %v610
    %v612 = vsub.f32 1.0, %v605
    %v613 = vmul.f32 %v612, %v611
    %v614 = vmul.f32 %v605, %v445
    %v615 = vadd.f32 %v613, %v614
    %s616 = sadd.s32 %s50, 2
    %p617 = scmp.lt.s32.totalorder %s616, 1
    %s618 = scalar_select %p617, 1, 0
    %v619 = vstv %s618
    %vm620 = vcmp.eq.s32.totalorder %v619, 1
    %v621 = vsel %vm620, %v615, %v445
    %s622 = scalar_lea.vmem [#allocation3], 3
    %v623 = vld [vmem:[%s622] ss:$8 sm:$0x7]
    %624 = vmatprep.subr.mxu0 %v53
    %625 = vmatpush1.msra.mxu0 %v52
    %626 = vmatprep.subr.mxu0 %v56
    %627 = vmatpush1.msra.mxu0 %v55
    %628 = vmatprep.subr.mxu0 %v59
    %629 = vmatpush1.msra.mxu0 %v58
    %630 = vmatprep.subr.mxu0 %v62
    %631 = vmatpush1.msra.mxu0 %v61
    %632 = vmatprep.subr.mxu0 %v65
    %633 = vmatpush1.msra.mxu0 %v64
    %634 = vmatprep.subr.mxu0 %v68
    %635 = vmatpush1.msra.mxu0 %v67
    %636 = vmatprep.subr.mxu0 %v71
    %637 = vmatpush1.msra.mxu0 %v70
    %638 = vmatprep.subr.mxu0 %v74
    %639 = vmatpush1.msra.mxu0 %v73
    %640 = vmatprep.subr.mxu0 %v77
    %641 = vmatpush1.msra.mxu0 %v76
    %642 = vmatprep.subr.mxu0 %v80
    %643 = vmatpush1.msra.mxu0 %v79
    %644 = vmatprep.subr.mxu0 %v83
    %645 = vmatpush1.msra.mxu0 %v82
    %646 = vmatprep.subr.mxu0 %v86
    %647 = vmatpush1.msra.mxu0 %v85
    %648 = vmatprep.subr.mxu0 %v89
    %649 = vmatpush1.msra.mxu0 %v88
    %650 = vmatprep.subr.mxu0 %v92
    %651 = vmatpush1.msra.mxu0 %v91
    %652 = vmatprep.subr.mxu0 %v95
    %653 = vmatpush1.msra.mxu0 %v94
    %654 = vmatprep.subr.mxu0 %v98
    %655 = vmatpush1.msra.mxu0 %v97
    %656 = vmatprep.subr.mxu0 0.0
    %657 = vmatpush1.msra.mxu0 0.0
    %658 = vmatprep.subr.mxu0 0.0
    %659 = vmatpush1.msra.mxu0 0.0
    %660 = vmatprep.subr.mxu0 0.0
    %661 = vmatpush1.msra.mxu0 0.0
    %662 = vmatprep.subr.mxu0 0.0
    %663 = vmatpush1.msra.mxu0 0.0
    %664 = vmatprep.subr.mxu0 0.0
    %665 = vmatpush1.msra.mxu0 0.0
    %666 = vmatprep.subr.mxu0 0.0
    %667 = vmatpush1.msra.mxu0 0.0
    %668 = vmatprep.subr.mxu0 0.0
    %669 = vmatpush1.msra.mxu0 0.0
    %670 = vmatprep.subr.mxu0 0.0
    %671 = vmatpush1.msra.mxu0 0.0
    %672 = vmatprep.subr.mxu0 0.0
    %673 = vmatpush1.msra.mxu0 0.0
    %674 = vmatprep.subr.mxu0 0.0
    %675 = vmatpush1.msra.mxu0 0.0
    %676 = vmatprep.subr.mxu0 0.0
    %677 = vmatpush1.msra.mxu0 0.0
    %678 = vmatprep.subr.mxu0 0.0
    %679 = vmatpush1.msra.mxu0 0.0
    %680 = vmatprep.subr.mxu0 0.0
    %681 = vmatpush1.msra.mxu0 0.0
    %682 = vmatprep.subr.mxu0 0.0
    %683 = vmatpush1.msra.mxu0 0.0
    %684 = vmatprep.subr.mxu0 0.0
    %685 = vmatpush1.msra.mxu0 0.0
    %686 = vmatprep.subr.mxu0 0.0
    %687 = vmatpush1.msra.mxu0 0.0
    %688 = vmatprep.mubr.f32.mxu0 0.0
    %689 = vmatmul.mubr.f32.gmra.mrb[0].mxu0 %v621
    %v690 = vpop.f32.mrb[0].mxu0
    %v691 = vadd.f32 0.0, %v690
    %v692 = vpop.f32.mrb[0].mxu0
    %v693 = vadd.f32 0.0, %v692
    %694 = vdwg.mxu0
    %695 = vmatprep.subr.mxu0 0.0
    %696 = vmatpush1.msra.mxu0 %v54
    %697 = vmatprep.subr.mxu0 0.0
    %698 = vmatpush1.msra.mxu0 %v57
    %699 = vmatprep.subr.mxu0 0.0
    %700 = vmatpush1.msra.mxu0 %v60
    %701 = vmatprep.subr.mxu0 0.0
    %702 = vmatpush1.msra.mxu0 %v63
    %703 = vmatprep.subr.mxu0 0.0
    %704 = vmatpush1.msra.mxu0 %v66
    %705 = vmatprep.subr.mxu0 0.0
    %706 = vmatpush1.msra.mxu0 %v69
    %707 = vmatprep.subr.mxu0 0.0
    %708 = vmatpush1.msra.mxu0 %v72
    %709 = vmatprep.subr.mxu0 0.0
    %710 = vmatpush1.msra.mxu0 %v75
    %711 = vmatprep.subr.mxu0 0.0
    %712 = vmatpush1.msra.mxu0 %v78
    %713 = vmatprep.subr.mxu0 0.0
    %714 = vmatpush1.msra.mxu0 %v81
    %715 = vmatprep.subr.mxu0 0.0
    %716 = vmatpush1.msra.mxu0 %v84
    %717 = vmatprep.subr.mxu0 0.0
    %718 = vmatpush1.msra.mxu0 %v87
    %719 = vmatprep.subr.mxu0 0.0
    %720 = vmatpush1.msra.mxu0 %v90
    %721 = vmatprep.subr.mxu0 0.0
    %722 = vmatpush1.msra.mxu0 %v93
    %723 = vmatprep.subr.mxu0 0.0
    %724 = vmatpush1.msra.mxu0 %v96
    %725 = vmatprep.subr.mxu0 0.0
    %726 = vmatpush1.msra.mxu0 %v99
    %727 = vmatprep.subr.mxu0 0.0
    %728 = vmatpush1.msra.mxu0 0.0
    %729 = vmatprep.subr.mxu0 0.0
    %730 = vmatpush1.msra.mxu0 0.0
    %731 = vmatprep.subr.mxu0 0.0
    %732 = vmatpush1.msra.mxu0 0.0
    %733 = vmatprep.subr.mxu0 0.0
    %734 = vmatpush1.msra.mxu0 0.0
    %735 = vmatprep.subr.mxu0 0.0
    %736 = vmatpush1.msra.mxu0 0.0
    %737 = vmatprep.subr.mxu0 0.0
    %738 = vmatpush1.msra.mxu0 0.0
    %739 = vmatprep.subr.mxu0 0.0
    %740 = vmatpush1.msra.mxu0 0.0
    %741 = vmatprep.subr.mxu0 0.0
    %742 = vmatpush1.msra.mxu0 0.0
    %743 = vmatprep.subr.mxu0 0.0
    %744 = vmatpush1.msra.mxu0 0.0
    %745 = vmatprep.subr.mxu0 0.0
    %746 = vmatpush1.msra.mxu0 0.0
    %747 = vmatprep.subr.mxu0 0.0
    %748 = vmatpush1.msra.mxu0 0.0
    %749 = vmatprep.subr.mxu0 0.0
    %750 = vmatpush1.msra.mxu0 0.0
    %751 = vmatprep.subr.mxu0 0.0
    %752 = vmatpush1.msra.mxu0 0.0
    %753 = vmatprep.subr.mxu0 0.0
    %754 = vmatpush1.msra.mxu0 0.0
    %755 = vmatprep.subr.mxu0 0.0
    %756 = vmatpush1.msra.mxu0 0.0
    %757 = vmatprep.subr.mxu0 0.0
    %758 = vmatpush1.msra.mxu0 0.0
    %759 = vmatprep.mubr.f32.mxu0 0.0
    %760 = vmatmul.mubr.f32.gmra.mrb[0].mxu0 %v621
    %v761 = vpop.f32.mrb[0].mxu0
    %v762 = vadd.f32 0.0, %v761
    %v763 = vpop.f32.mrb[0].mxu0
    %764 = vdwg.mxu0
    %v765 = vadd.f32 %v623, %v691
    %v766 = vxor.u32 %v765, 2147483648
    %v767 = vmul.f32 %v766, 1.442695
    %v768 = vpow.pop %v767
    %v769 = vadd.f32 %v768, 1.0
    %v770 = vrcp.pop %v769
    %v771 = vmul.f32 1.0, %v770
    %v773 = vrot.slane %v623, 1
    %v775 = vadd.f32 %v773, %v693
    %v776 = vxor.u32 %v775, 2147483648
    %v777 = vmul.f32 %v776, 1.442695
    %v778 = vpow.pop %v777
    %v779 = vadd.f32 %v778, 1.0
    %v780 = vrcp.pop %v779
    %v781 = vmul.f32 1.0, %v780
    %v782 = vadd.f32 %v762, %v100
    %v783 = vmul.f32 %v771, %v782
    %v784 = vrot.slane %v623, 2
    %v786 = vadd.f32 %v784, %v783
    %v787 = vtanh.pop %v786
    %v788 = vsub.f32 1.0, %v781
    %v789 = vmul.f32 %v788, %v787
    %v790 = vmul.f32 %v781, %v621
    %v791 = vadd.f32 %v789, %v790
    %s792 = sadd.s32 %s50, 3
    %p793 = scmp.lt.s32.totalorder %s792, 1
    %s794 = scalar_select %p793, 1, 0
    %v795 = vstv %s794
    %vm796 = vcmp.eq.s32.totalorder %v795, 1
    %v797 = vsel %vm796, %v791, %v621
    %s798 = scalar_lea.vmem [#allocation3], 4
    %v799 = vld [vmem:[%s798] ss:$8 sm:$0x7]
    %800 = vmatprep.subr.mxu0 %v53
    %801 = vmatpush1.msra.mxu0 %v52
    %802 = vmatprep.subr.mxu0 %v56
    %803 = vmatpush1.msra.mxu0 %v55
    %804 = vmatprep.subr.mxu0 %v59
    %805 = vmatpush1.msra.mxu0 %v58
    %806 = vmatprep.subr.mxu0 %v62
    %807 = vmatpush1.msra.mxu0 %v61
    %808 = vmatprep.subr.mxu0 %v65
    %809 = vmatpush1.msra.mxu0 %v64
    %810 = vmatprep.subr.mxu0 %v68
    %811 = vmatpush1.msra.mxu0 %v67
    %812 = vmatprep.subr.mxu0 %v71
    %813 = vmatpush1.msra.mxu0 %v70
    %814 = vmatprep.subr.mxu0 %v74
    %815 = vmatpush1.msra.mxu0 %v73
    %816 = vmatprep.subr.mxu0 %v77
    %817 = vmatpush1.msra.mxu0 %v76
    %818 = vmatprep.subr.mxu0 %v80
    %819 = vmatpush1.msra.mxu0 %v79
    %820 = vmatprep.subr.mxu0 %v83
    %821 = vmatpush1.msra.mxu0 %v82
    %822 = vmatprep.subr.mxu0 %v86
    %823 = vmatpush1.msra.mxu0 %v85
    %824 = vmatprep.subr.mxu0 %v89
    %825 = vmatpush1.msra.mxu0 %v88
    %826 = vmatprep.subr.mxu0 %v92
    %827 = vmatpush1.msra.mxu0 %v91
    %828 = vmatprep.subr.mxu0 %v95
    %829 = vmatpush1.msra.mxu0 %v94
    %830 = vmatprep.subr.mxu0 %v98
    %831 = vmatpush1.msra.mxu0 %v97
    %832 = vmatprep.subr.mxu0 0.0
    %833 = vmatpush1.msra.mxu0 0.0
    %834 = vmatprep.subr.mxu0 0.0
    %835 = vmatpush1.msra.mxu0 0.0
    %836 = vmatprep.subr.mxu0 0.0
    %837 = vmatpush1.msra.mxu0 0.0
    %838 = vmatprep.subr.mxu0 0.0
    %839 = vmatpush1.msra.mxu0 0.0
    %840 = vmatprep.subr.mxu0 0.0
    %841 = vmatpush1.msra.mxu0 0.0
    %842 = vmatprep.subr.mxu0 0.0
    %843 = vmatpush1.msra.mxu0 0.0
    %844 = vmatprep.subr.mxu0 0.0
    %845 = vmatpush1.msra.mxu0 0.0
    %846 = vmatprep.subr.mxu0 0.0
    %847 = vmatpush1.msra.mxu0 0.0
    %848 = vmatprep.subr.mxu0 0.0
    %849 = vmatpush1.msra.mxu0 0.0
    %850 = vmatprep.subr.mxu0 0.0
    %851 = vmatpush1.msra.mxu0 0.0
    %852 = vmatprep.subr.mxu0 0.0
    %853 = vmatpush1.msra.mxu0 0.0
    %854 = vmatprep.subr.mxu0 0.0
    %855 = vmatpush1.msra.mxu0 0.0
    %856 = vmatprep.subr.mxu0 0.0
    %857 = vmatpush1.msra.mxu0 0.0
    %858 = vmatprep.subr.mxu0 0.0
    %859 = vmatpush1.msra.mxu0 0.0
    %860 = vmatprep.subr.mxu0 0.0
    %861 = vmatpush1.msra.mxu0 0.0
    %862 = vmatprep.subr.mxu0 0.0
    %863 = vmatpush1.msra.mxu0 0.0
    %864 = vmatprep.mubr.f32.mxu0 0.0
    %865 = vmatmul.mubr.f32.gmra.mrb[0].mxu0 %v797
    %v866 = vpop.f32.mrb[0].mxu0
    %v867 = vadd.f32 0.0, %v866
    %v868 = vpop.f32.mrb[0].mxu0
    %v869 = vadd.f32 0.0, %v868
    %870 = vdwg.mxu0
    %871 = vmatprep.subr.mxu0 0.0
    %872 = vmatpush1.msra.mxu0 %v54
    %873 = vmatprep.subr.mxu0 0.0
    %874 = vmatpush1.msra.mxu0 %v57
    %875 = vmatprep.subr.mxu0 0.0
    %876 = vmatpush1.msra.mxu0 %v60
    %877 = vmatprep.subr.mxu0 0.0
    %878 = vmatpush1.msra.mxu0 %v63
    %879 = vmatprep.subr.mxu0 0.0
    %880 = vmatpush1.msra.mxu0 %v66
    %881 = vmatprep.subr.mxu0 0.0
    %882 = vmatpush1.msra.mxu0 %v69
    %883 = vmatprep.subr.mxu0 0.0
    %884 = vmatpush1.msra.mxu0 %v72
    %885 = vmatprep.subr.mxu0 0.0
    %886 = vmatpush1.msra.mxu0 %v75
    %887 = vmatprep.subr.mxu0 0.0
    %888 = vmatpush1.msra.mxu0 %v78
    %889 = vmatprep.subr.mxu0 0.0
    %890 = vmatpush1.msra.mxu0 %v81
    %891 = vmatprep.subr.mxu0 0.0
    %892 = vmatpush1.msra.mxu0 %v84
    %893 = vmatprep.subr.mxu0 0.0
    %894 = vmatpush1.msra.mxu0 %v87
    %895 = vmatprep.subr.mxu0 0.0
    %896 = vmatpush1.msra.mxu0 %v90
    %897 = vmatprep.subr.mxu0 0.0
    %898 = vmatpush1.msra.mxu0 %v93
    %899 = vmatprep.subr.mxu0 0.0
    %900 = vmatpush1.msra.mxu0 %v96
    %901 = vmatprep.subr.mxu0 0.0
    %902 = vmatpush1.msra.mxu0 %v99
    %903 = vmatprep.subr.mxu0 0.0
    %904 = vmatpush1.msra.mxu0 0.0
    %905 = vmatprep.subr.mxu0 0.0
    %906 = vmatpush1.msra.mxu0 0.0
    %907 = vmatprep.subr.mxu0 0.0
    %908 = vmatpush1.msra.mxu0 0.0
    %909 = vmatprep.subr.mxu0 0.0
    %910 = vmatpush1.msra.mxu0 0.0
    %911 = vmatprep.subr.mxu0 0.0
    %912 = vmatpush1.msra.mxu0 0.0
    %913 = vmatprep.subr.mxu0 0.0
    %914 = vmatpush1.msra.mxu0 0.0
    %915 = vmatprep.subr.mxu0 0.0
    %916 = vmatpush1.msra.mxu0 0.0
    %917 = vmatprep.subr.mxu0 0.0
    %918 = vmatpush1.msra.mxu0 0.0
    %919 = vmatprep.subr.mxu0 0.0
    %920 = vmatpush1.msra.mxu0 0.0
    %921 = vmatprep.subr.mxu0 0.0
    %922 = vmatpush1.msra.mxu0 0.0
    %923 = vmatprep.subr.mxu0 0.0
    %924 = vmatpush1.msra.mxu0 0.0
    %925 = vmatprep.subr.mxu0 0.0
    %926 = vmatpush1.msra.mxu0 0.0
    %927 = vmatprep.subr.mxu0 0.0
    %928 = vmatpush1.msra.mxu0 0.0
    %929 = vmatprep.subr.mxu0 0.0
    %930 = vmatpush1.msra.mxu0 0.0
    %931 = vmatprep.subr.mxu0 0.0
    %932 = vmatpush1.msra.mxu0 0.0
    %933 = vmatprep.subr.mxu0 0.0
    %934 = vmatpush1.msra.mxu0 0.0
    %935 = vmatprep.mubr.f32.mxu0 0.0
    %936 = vmatmul.mubr.f32.gmra.mrb[0].mxu0 %v797
    %v937 = vpop.f32.mrb[0].mxu0
    %v938 = vadd.f32 0.0, %v937
    %v939 = vpop.f32.mrb[0].mxu0
    %940 = vdwg.mxu0
    %v941 = vadd.f32 %v799, %v867
    %v942 = vxor.u32 %v941, 2147483648
    %v943 = vmul.f32 %v942, 1.442695
    %v944 = vpow.pop %v943
    %v945 = vadd.f32 %v944, 1.0
    %v946 = vrcp.pop %v945
    %v947 = vmul.f32 1.0, %v946
    %v949 = vrot.slane %v799, 1
    %v951 = vadd.f32 %v949, %v869
    %v952 = vxor.u32 %v951, 2147483648
    %v953 = vmul.f32 %v952, 1.442695
    %v954 = vpow.pop %v953
    %v955 = vadd.f32 %v954, 1.0
    %v956 = vrcp.pop %v955
    %v957 = vmul.f32 1.0, %v956
    %v958 = vadd.f32 %v938, %v100
    %v959 = vmul.f32 %v947, %v958
    %v960 = vrot.slane %v799, 2
    %v962 = vadd.f32 %v960, %v959
    %v963 = vtanh.pop %v962
    %v964 = vsub.f32 1.0, %v957
    %v965 = vmul.f32 %v964, %v963
    %v966 = vmul.f32 %v957, %v797
    %v967 = vadd.f32 %v965, %v966
    %s968 = sadd.s32 %s50, 4
    %p969 = scmp.lt.s32.totalorder %s968, 1
    %s970 = scalar_select %p969, 1, 0
    %v971 = vstv %s970
    %vm972 = vcmp.eq.s32.totalorder %v971, 1
    %v973 = vsel %vm972, %v967, %v797
    %s974 = scalar_lea.vmem [#allocation3], 5
    %v975 = vld [vmem:[%s974] ss:$8 sm:$0x7]
    %976 = vmatprep.subr.mxu0 %v53
    %977 = vmatpush1.msra.mxu0 %v52
    %978 = vmatprep.subr.mxu0 %v56
    %979 = vmatpush1.msra.mxu0 %v55
    %980 = vmatprep.subr.mxu0 %v59
    %981 = vmatpush1.msra.mxu0 %v58
    %982 = vmatprep.subr.mxu0 %v62
    %983 = vmatpush1.msra.mxu0 %v61
    %984 = vmatprep.subr.mxu0 %v65
    %985 = vmatpush1.msra.mxu0 %v64
    %986 = vmatprep.subr.mxu0 %v68
    %987 = vmatpush1.msra.mxu0 %v67
    %988 = vmatprep.subr.mxu0 %v71
    %989 = vmatpush1.msra.mxu0 %v70
    %990 = vmatprep.subr.mxu0 %v74
    %991 = vmatpush1.msra.mxu0 %v73
    %992 = vmatprep.subr.mxu0 %v77
    %993 = vmatpush1.msra.mxu0 %v76
    %994 = vmatprep.subr.mxu0 %v80
    %995 = vmatpush1.msra.mxu0 %v79
    %996 = vmatprep.subr.mxu0 %v83
    %997 = vmatpush1.msra.mxu0 %v82
    %998 = vmatprep.subr.mxu0 %v86
    %999 = vmatpush1.msra.mxu0 %v85
    %1000 = vmatprep.subr.mxu0 %v89
    %1001 = vmatpush1.msra.mxu0 %v88
    %1002 = vmatprep.subr.mxu0 %v92
    %1003 = vmatpush1.msra.mxu0 %v91
    %1004 = vmatprep.subr.mxu0 %v95
    %1005 = vmatpush1.msra.mxu0 %v94
    %1006 = vmatprep.subr.mxu0 %v98
    %1007 = vmatpush1.msra.mxu0 %v97
    %1008 = vmatprep.subr.mxu0 0.0
    %1009 = vmatpush1.msra.mxu0 0.0
    %1010 = vmatprep.subr.mxu0 0.0
    %1011 = vmatpush1.msra.mxu0 0.0
    %1012 = vmatprep.subr.mxu0 0.0
    %1013 = vmatpush1.msra.mxu0 0.0
    %1014 = vmatprep.subr.mxu0 0.0
    %1015 = vmatpush1.msra.mxu0 0.0
    %1016 = vmatprep.subr.mxu0 0.0
    %1017 = vmatpush1.msra.mxu0 0.0
    %1018 = vmatprep.subr.mxu0 0.0
    %1019 = vmatpush1.msra.mxu0 0.0
    %1020 = vmatprep.subr.mxu0 0.0
    %1021 = vmatpush1.msra.mxu0 0.0
    %1022 = vmatprep.subr.mxu0 0.0
    %1023 = vmatpush1.msra.mxu0 0.0
    %1024 = vmatprep.subr.mxu0 0.0
    %1025 = vmatpush1.msra.mxu0 0.0
    %1026 = vmatprep.subr.mxu0 0.0
    %1027 = vmatpush1.msra.mxu0 0.0
    %1028 = vmatprep.subr.mxu0 0.0
    %1029 = vmatpush1.msra.mxu0 0.0
    %1030 = vmatprep.subr.mxu0 0.0
    %1031 = vmatpush1.msra.mxu0 0.0
    %1032 = vmatprep.subr.mxu0 0.0
    %1033 = vmatpush1.msra.mxu0 0.0
    %1034 = vmatprep.subr.mxu0 0.0
    %1035 = vmatpush1.msra.mxu0 0.0
    %1036 = vmatprep.subr.mxu0 0.0
    %1037 = vmatpush1.msra.mxu0 0.0
    %1038 = vmatprep.subr.mxu0 0.0
    %1039 = vmatpush1.msra.mxu0 0.0
    %1040 = vmatprep.mubr.f32.mxu0 0.0
    %1041 = vmatmul.mubr.f32.gmra.mrb[0].mxu0 %v973
    %v1042 = vpop.f32.mrb[0].mxu0
    %v1043 = vadd.f32 0.0, %v1042
    %v1044 = vpop.f32.mrb[0].mxu0
    %v1045 = vadd.f32 0.0, %v1044
    %1046 = vdwg.mxu0
    %1047 = vmatprep.subr.mxu0 0.0
    %1048 = vmatpush1.msra.mxu0 %v54
    %1049 = vmatprep.subr.mxu0 0.0
    %1050 = vmatpush1.msra.mxu0 %v57
    %1051 = vmatprep.subr.mxu0 0.0
    %1052 = vmatpush1.msra.mxu0 %v60
    %1053 = vmatprep.subr.mxu0 0.0
    %1054 = vmatpush1.msra.mxu0 %v63
    %1055 = vmatprep.subr.mxu0 0.0
    %1056 = vmatpush1.msra.mxu0 %v66
    %1057 = vmatprep.subr.mxu0 0.0
    %1058 = vmatpush1.msra.mxu0 %v69
    %1059 = vmatprep.subr.mxu0 0.0
    %1060 = vmatpush1.msra.mxu0 %v72
    %1061 = vmatprep.subr.mxu0 0.0
    %1062 = vmatpush1.msra.mxu0 %v75
    %1063 = vmatprep.subr.mxu0 0.0
    %1064 = vmatpush1.msra.mxu0 %v78
    %1065 = vmatprep.subr.mxu0 0.0
    %1066 = vmatpush1.msra.mxu0 %v81
    %1067 = vmatprep.subr.mxu0 0.0
    %1068 = vmatpush1.msra.mxu0 %v84
    %1069 = vmatprep.subr.mxu0 0.0
    %1070 = vmatpush1.msra.mxu0 %v87
    %1071 = vmatprep.subr.mxu0 0.0
    %1072 = vmatpush1.msra.mxu0 %v90
    %1073 = vmatprep.subr.mxu0 0.0
    %1074 = vmatpush1.msra.mxu0 %v93
    %1075 = vmatprep.subr.mxu0 0.0
    %1076 = vmatpush1.msra.mxu0 %v96
    %1077 = vmatprep.subr.mxu0 0.0
    %1078 = vmatpush1.msra.mxu0 %v99
    %1079 = vmatprep.subr.mxu0 0.0
    %1080 = vmatpush1.msra.mxu0 0.0
    %1081 = vmatprep.subr.mxu0 0.0
    %1082 = vmatpush1.msra.mxu0 0.0
    %1083 = vmatprep.subr.mxu0 0.0
    %1084 = vmatpush1.msra.mxu0 0.0
    %1085 = vmatprep.subr.mxu0 0.0
    %1086 = vmatpush1.msra.mxu0 0.0
    %1087 = vmatprep.subr.mxu0 0.0
    %1088 = vmatpush1.msra.mxu0 0.0
    %1089 = vmatprep.subr.mxu0 0.0
    %1090 = vmatpush1.msra.mxu0 0.0
    %1091 = vmatprep.subr.mxu0 0.0
    %1092 = vmatpush1.msra.mxu0 0.0
    %1093 = vmatprep.subr.mxu0 0.0
    %1094 = vmatpush1.msra.mxu0 0.0
    %1095 = vmatprep.subr.mxu0 0.0
    %1096 = vmatpush1.msra.mxu0 0.0
    %1097 = vmatprep.subr.mxu0 0.0
    %1098 = vmatpush1.msra.mxu0 0.0
    %1099 = vmatprep.subr.mxu0 0.0
    %1100 = vmatpush1.msra.mxu0 0.0
    %1101 = vmatprep.subr.mxu0 0.0
    %1102 = vmatpush1.msra.mxu0 0.0
    %1103 = vmatprep.subr.mxu0 0.0
    %1104 = vmatpush1.msra.mxu0 0.0
    %1105 = vmatprep.subr.mxu0 0.0
    %1106 = vmatpush1.msra.mxu0 0.0
    %1107 = vmatprep.subr.mxu0 0.0
    %1108 = vmatpush1.msra.mxu0 0.0
    %1109 = vmatprep.subr.mxu0 0.0
    %1110 = vmatpush1.msra.mxu0 0.0
    %1111 = vmatprep.mubr.f32.mxu0 0.0
    %1112 = vmatmul.mubr.f32.gmra.mrb[0].mxu0 %v973
    %v1113 = vpop.f32.mrb[0].mxu0
    %v1114 = vadd.f32 0.0, %v1113
    %v1115 = vpop.f32.mrb[0].mxu0
    %1116 = vdwg.mxu0
    %v1117 = vadd.f32 %v975, %v1043
    %v1118 = vxor.u32 %v1117, 2147483648
    %v1119 = vmul.f32 %v1118, 1.442695
    %v1120 = vpow.pop %v1119
    %v1121 = vadd.f32 %v1120, 1.0
    %v1122 = vrcp.pop %v1121
    %v1123 = vmul.f32 1.0, %v1122
    %v1125 = vrot.slane %v975, 1
    %v1127 = vadd.f32 %v1125, %v1045
    %v1128 = vxor.u32 %v1127, 2147483648
    %v1129 = vmul.f32 %v1128, 1.442695
    %v1130 = vpow.pop %v1129
    %v1131 = vadd.f32 %v1130, 1.0
    %v1132 = vrcp.pop %v1131
    %v1133 = vmul.f32 1.0, %v1132
    %v1134 = vadd.f32 %v1114, %v100
    %v1135 = vmul.f32 %v1123, %v1134
    %v1136 = vrot.slane %v975, 2
    %v1138 = vadd.f32 %v1136, %v1135
    %v1139 = vtanh.pop %v1138
    %v1140 = vsub.f32 1.0, %v1133
    %v1141 = vmul.f32 %v1140, %v1139
    %v1142 = vmul.f32 %v1133, %v973
    %v1143 = vadd.f32 %v1141, %v1142
    %s1144 = sadd.s32 %s50, 5
    %p1145 = scmp.lt.s32.totalorder %s1144, 1
    %s1146 = scalar_select %p1145, 1, 0
    %v1147 = vstv %s1146
    %vm1148 = vcmp.eq.s32.totalorder %v1147, 1
    %v1149 = vsel %vm1148, %v1143, %v973
    %s1150 = scalar_lea.vmem [#allocation3], 6
    %v1151 = vld [vmem:[%s1150] ss:$8 sm:$0x7]
    %1152 = vmatprep.subr.mxu0 %v53
    %1153 = vmatpush1.msra.mxu0 %v52
    %1154 = vmatprep.subr.mxu0 %v56
    %1155 = vmatpush1.msra.mxu0 %v55
    %1156 = vmatprep.subr.mxu0 %v59
    %1157 = vmatpush1.msra.mxu0 %v58
    %1158 = vmatprep.subr.mxu0 %v62
    %1159 = vmatpush1.msra.mxu0 %v61
    %1160 = vmatprep.subr.mxu0 %v65
    %1161 = vmatpush1.msra.mxu0 %v64
    %1162 = vmatprep.subr.mxu0 %v68
    %1163 = vmatpush1.msra.mxu0 %v67
    %1164 = vmatprep.subr.mxu0 %v71
    %1165 = vmatpush1.msra.mxu0 %v70
    %1166 = vmatprep.subr.mxu0 %v74
    %1167 = vmatpush1.msra.mxu0 %v73
    %1168 = vmatprep.subr.mxu0 %v77
    %1169 = vmatpush1.msra.mxu0 %v76
    %1170 = vmatprep.subr.mxu0 %v80
    %1171 = vmatpush1.msra.mxu0 %v79
    %1172 = vmatprep.subr.mxu0 %v83
    %1173 = vmatpush1.msra.mxu0 %v82
    %1174 = vmatprep.subr.mxu0 %v86
    %1175 = vmatpush1.msra.mxu0 %v85
    %1176 = vmatprep.subr.mxu0 %v89
    %1177 = vmatpush1.msra.mxu0 %v88
    %1178 = vmatprep.subr.mxu0 %v92
    %1179 = vmatpush1.msra.mxu0 %v91
    %1180 = vmatprep.subr.mxu0 %v95
    %1181 = vmatpush1.msra.mxu0 %v94
    %1182 = vmatprep.subr.mxu0 %v98
    %1183 = vmatpush1.msra.mxu0 %v97
    %1184 = vmatprep.subr.mxu0 0.0
    %1185 = vmatpush1.msra.mxu0 0.0
    %1186 = vmatprep.subr.mxu0 0.0
    %1187 = vmatpush1.msra.mxu0 0.0
    %1188 = vmatprep.subr.mxu0 0.0
    %1189 = vmatpush1.msra.mxu0 0.0
    %1190 = vmatprep.subr.mxu0 0.0
    %1191 = vmatpush1.msra.mxu0 0.0
    %1192 = vmatprep.subr.mxu0 0.0
    %1193 = vmatpush1.msra.mxu0 0.0
    %1194 = vmatprep.subr.mxu0 0.0
    %1195 = vmatpush1.msra.mxu0 0.0
    %1196 = vmatprep.subr.mxu0 0.0
    %1197 = vmatpush1.msra.mxu0 0.0
    %1198 = vmatprep.subr.mxu0 0.0
    %1199 = vmatpush1.msra.mxu0 0.0
    %1200 = vmatprep.subr.mxu0 0.0
    %1201 = vmatpush1.msra.mxu0 0.0
    %1202 = vmatprep.subr.mxu0 0.0
    %1203 = vmatpush1.msra.mxu0 0.0
    %1204 = vmatprep.subr.mxu0 0.0
    %1205 = vmatpush1.msra.mxu0 0.0
    %1206 = vmatprep.subr.mxu0 0.0
    %1207 = vmatpush1.msra.mxu0 0.0
    %1208 = vmatprep.subr.mxu0 0.0
    %1209 = vmatpush1.msra.mxu0 0.0
    %1210 = vmatprep.subr.mxu0 0.0
    %1211 = vmatpush1.msra.mxu0 0.0
    %1212 = vmatprep.subr.mxu0 0.0
    %1213 = vmatpush1.msra.mxu0 0.0
    %1214 = vmatprep.subr.mxu0 0.0
    %1215 = vmatpush1.msra.mxu0 0.0
    %1216 = vmatprep.mubr.f32.mxu0 0.0
    %1217 = vmatmul.mubr.f32.gmra.mrb[0].mxu0 %v1149
    %v1218 = vpop.f32.mrb[0].mxu0
    %v1219 = vadd.f32 0.0, %v1218
    %v1220 = vpop.f32.mrb[0].mxu0
    %v1221 = vadd.f32 0.0, %v1220
    %1222 = vdwg.mxu0
    %1223 = vmatprep.subr.mxu0 0.0
    %1224 = vmatpush1.msra.mxu0 %v54
    %1225 = vmatprep.subr.mxu0 0.0
    %1226 = vmatpush1.msra.mxu0 %v57
    %1227 = vmatprep.subr.mxu0 0.0
    %1228 = vmatpush1.msra.mxu0 %v60
    %1229 = vmatprep.subr.mxu0 0.0
    %1230 = vmatpush1.msra.mxu0 %v63
    %1231 = vmatprep.subr.mxu0 0.0
    %1232 = vmatpush1.msra.mxu0 %v66
    %1233 = vmatprep.subr.mxu0 0.0
    %1234 = vmatpush1.msra.mxu0 %v69
    %1235 = vmatprep.subr.mxu0 0.0
    %1236 = vmatpush1.msra.mxu0 %v72
    %1237 = vmatprep.subr.mxu0 0.0
    %1238 = vmatpush1.msra.mxu0 %v75
    %1239 = vmatprep.subr.mxu0 0.0
    %1240 = vmatpush1.msra.mxu0 %v78
    %1241 = vmatprep.subr.mxu0 0.0
    %1242 = vmatpush1.msra.mxu0 %v81
    %1243 = vmatprep.subr.mxu0 0.0
    %1244 = vmatpush1.msra.mxu0 %v84
    %1245 = vmatprep.subr.mxu0 0.0
    %1246 = vmatpush1.msra.mxu0 %v87
    %1247 = vmatprep.subr.mxu0 0.0
    %1248 = vmatpush1.msra.mxu0 %v90
    %1249 = vmatprep.subr.mxu0 0.0
    %1250 = vmatpush1.msra.mxu0 %v93
    %1251 = vmatprep.subr.mxu0 0.0
    %1252 = vmatpush1.msra.mxu0 %v96
    %1253 = vmatprep.subr.mxu0 0.0
    %1254 = vmatpush1.msra.mxu0 %v99
    %1255 = vmatprep.subr.mxu0 0.0
    %1256 = vmatpush1.msra.mxu0 0.0
    %1257 = vmatprep.subr.mxu0 0.0
    %1258 = vmatpush1.msra.mxu0 0.0
    %1259 = vmatprep.subr.mxu0 0.0
    %1260 = vmatpush1.msra.mxu0 0.0
    %1261 = vmatprep.subr.mxu0 0.0
    %1262 = vmatpush1.msra.mxu0 0.0
    %1263 = vmatprep.subr.mxu0 0.0
    %1264 = vmatpush1.msra.mxu0 0.0
    %1265 = vmatprep.subr.mxu0 0.0
    %1266 = vmatpush1.msra.mxu0 0.0
    %1267 = vmatprep.subr.mxu0 0.0
    %1268 = vmatpush1.msra.mxu0 0.0
    %1269 = vmatprep.subr.mxu0 0.0
    %1270 = vmatpush1.msra.mxu0 0.0
    %1271 = vmatprep.subr.mxu0 0.0
    %1272 = vmatpush1.msra.mxu0 0.0
    %1273 = vmatprep.subr.mxu0 0.0
    %1274 = vmatpush1.msra.mxu0 0.0
    %1275 = vmatprep.subr.mxu0 0.0
    %1276 = vmatpush1.msra.mxu0 0.0
    %1277 = vmatprep.subr.mxu0 0.0
    %1278 = vmatpush1.msra.mxu0 0.0
    %1279 = vmatprep.subr.mxu0 0.0
    %1280 = vmatpush1.msra.mxu0 0.0
    %1281 = vmatprep.subr.mxu0 0.0
    %1282 = vmatpush1.msra.mxu0 0.0
    %1283 = vmatprep.subr.mxu0 0.0
    %1284 = vmatpush1.msra.mxu0 0.0
    %1285 = vmatprep.subr.mxu0 0.0
    %1286 = vmatpush1.msra.mxu0 0.0
    %1287 = vmatprep.mubr.f32.mxu0 0.0
    %1288 = vmatmul.mubr.f32.gmra.mrb[0].mxu0 %v1149
    %v1289 = vpop.f32.mrb[0].mxu0
    %v1290 = vadd.f32 0.0, %v1289
    %v1291 = vpop.f32.mrb[0].mxu0
    %1292 = vdwg.mxu0
    %v1293 = vadd.f32 %v1151, %v1219
    %v1294 = vxor.u32 %v1293, 2147483648
    %v1295 = vmul.f32 %v1294, 1.442695
    %v1296 = vpow.pop %v1295
    %v1297 = vadd.f32 %v1296, 1.0
    %v1298 = vrcp.pop %v1297
    %v1299 = vmul.f32 1.0, %v1298
    %v1301 = vrot.slane %v1151, 1
    %v1303 = vadd.f32 %v1301, %v1221
    %v1304 = vxor.u32 %v1303, 2147483648
    %v1305 = vmul.f32 %v1304, 1.442695
    %v1306 = vpow.pop %v1305
    %v1307 = vadd.f32 %v1306, 1.0
    %v1308 = vrcp.pop %v1307
    %v1309 = vmul.f32 1.0, %v1308
    %v1310 = vadd.f32 %v1290, %v100
    %v1311 = vmul.f32 %v1299, %v1310
    %v1312 = vrot.slane %v1151, 2
    %v1314 = vadd.f32 %v1312, %v1311
    %v1315 = vtanh.pop %v1314
    %v1316 = vsub.f32 1.0, %v1309
    %v1317 = vmul.f32 %v1316, %v1315
    %v1318 = vmul.f32 %v1309, %v1149
    %v1319 = vadd.f32 %v1317, %v1318
    %s1320 = sadd.s32 %s50, 6
    %p1321 = scmp.lt.s32.totalorder %s1320, 1
    %s1322 = scalar_select %p1321, 1, 0
    %v1323 = vstv %s1322
    %vm1324 = vcmp.eq.s32.totalorder %v1323, 1
    %v1325 = vsel %vm1324, %v1319, %v1149
    %s1326 = scalar_lea.vmem [#allocation3], 7
    %v1327 = vld [vmem:[%s1326] ss:$8 sm:$0x7]
    %1328 = vmatprep.subr.mxu0 %v53
    %1329 = vmatpush1.msra.mxu0 %v52
    %1330 = vmatprep.subr.mxu0 %v56
    %1331 = vmatpush1.msra.mxu0 %v55
    %1332 = vmatprep.subr.mxu0 %v59
    %1333 = vmatpush1.msra.mxu0 %v58
    %1334 = vmatprep.subr.mxu0 %v62
    %1335 = vmatpush1.msra.mxu0 %v61
    %1336 = vmatprep.subr.mxu0 %v65
    %1337 = vmatpush1.msra.mxu0 %v64
    %1338 = vmatprep.subr.mxu0 %v68
    %1339 = vmatpush1.msra.mxu0 %v67
    %1340 = vmatprep.subr.mxu0 %v71
    %1341 = vmatpush1.msra.mxu0 %v70
    %1342 = vmatprep.subr.mxu0 %v74
    %1343 = vmatpush1.msra.mxu0 %v73
    %1344 = vmatprep.subr.mxu0 %v77
    %1345 = vmatpush1.msra.mxu0 %v76
    %1346 = vmatprep.subr.mxu0 %v80
    %1347 = vmatpush1.msra.mxu0 %v79
    %1348 = vmatprep.subr.mxu0 %v83
    %1349 = vmatpush1.msra.mxu0 %v82
    %1350 = vmatprep.subr.mxu0 %v86
    %1351 = vmatpush1.msra.mxu0 %v85
    %1352 = vmatprep.subr.mxu0 %v89
    %1353 = vmatpush1.msra.mxu0 %v88
    %1354 = vmatprep.subr.mxu0 %v92
    %1355 = vmatpush1.msra.mxu0 %v91
    %1356 = vmatprep.subr.mxu0 %v95
    %1357 = vmatpush1.msra.mxu0 %v94
    %1358 = vmatprep.subr.mxu0 %v98
    %1359 = vmatpush1.msra.mxu0 %v97
    %1360 = vmatprep.subr.mxu0 0.0
    %1361 = vmatpush1.msra.mxu0 0.0
    %1362 = vmatprep.subr.mxu0 0.0
    %1363 = vmatpush1.msra.mxu0 0.0
    %1364 = vmatprep.subr.mxu0 0.0
    %1365 = vmatpush1.msra.mxu0 0.0
    %1366 = vmatprep.subr.mxu0 0.0
    %1367 = vmatpush1.msra.mxu0 0.0
    %1368 = vmatprep.subr.mxu0 0.0
    %1369 = vmatpush1.msra.mxu0 0.0
    %1370 = vmatprep.subr.mxu0 0.0
    %1371 = vmatpush1.msra.mxu0 0.0
    %1372 = vmatprep.subr.mxu0 0.0
    %1373 = vmatpush1.msra.mxu0 0.0
    %1374 = vmatprep.subr.mxu0 0.0
    %1375 = vmatpush1.msra.mxu0 0.0
    %1376 = vmatprep.subr.mxu0 0.0
    %1377 = vmatpush1.msra.mxu0 0.0
    %1378 = vmatprep.subr.mxu0 0.0
    %1379 = vmatpush1.msra.mxu0 0.0
    %1380 = vmatprep.subr.mxu0 0.0
    %1381 = vmatpush1.msra.mxu0 0.0
    %1382 = vmatprep.subr.mxu0 0.0
    %1383 = vmatpush1.msra.mxu0 0.0
    %1384 = vmatprep.subr.mxu0 0.0
    %1385 = vmatpush1.msra.mxu0 0.0
    %1386 = vmatprep.subr.mxu0 0.0
    %1387 = vmatpush1.msra.mxu0 0.0
    %1388 = vmatprep.subr.mxu0 0.0
    %1389 = vmatpush1.msra.mxu0 0.0
    %1390 = vmatprep.subr.mxu0 0.0
    %1391 = vmatpush1.msra.mxu0 0.0
    %1392 = vmatprep.mubr.f32.mxu0 0.0
    %1393 = vmatmul.mubr.f32.gmra.mrb[0].mxu0 %v1325
    %v1394 = vpop.f32.mrb[0].mxu0
    %v1395 = vadd.f32 0.0, %v1394
    %v1396 = vpop.f32.mrb[0].mxu0
    %v1397 = vadd.f32 0.0, %v1396
    %1398 = vdwg.mxu0
    %1399 = vmatprep.subr.mxu0 0.0
    %1400 = vmatpush1.msra.mxu0 %v54
    %1401 = vmatprep.subr.mxu0 0.0
    %1402 = vmatpush1.msra.mxu0 %v57
    %1403 = vmatprep.subr.mxu0 0.0
    %1404 = vmatpush1.msra.mxu0 %v60
    %1405 = vmatprep.subr.mxu0 0.0
    %1406 = vmatpush1.msra.mxu0 %v63
    %1407 = vmatprep.subr.mxu0 0.0
    %1408 = vmatpush1.msra.mxu0 %v66
    %1409 = vmatprep.subr.mxu0 0.0
    %1410 = vmatpush1.msra.mxu0 %v69
    %1411 = vmatprep.subr.mxu0 0.0
    %1412 = vmatpush1.msra.mxu0 %v72
    %1413 = vmatprep.subr.mxu0 0.0
    %1414 = vmatpush1.msra.mxu0 %v75
    %1415 = vmatprep.subr.mxu0 0.0
    %1416 = vmatpush1.msra.mxu0 %v78
    %1417 = vmatprep.subr.mxu0 0.0
    %1418 = vmatpush1.msra.mxu0 %v81
    %1419 = vmatprep.subr.mxu0 0.0
    %1420 = vmatpush1.msra.mxu0 %v84
    %1421 = vmatprep.subr.mxu0 0.0
    %1422 = vmatpush1.msra.mxu0 %v87
    %1423 = vmatprep.subr.mxu0 0.0
    %1424 = vmatpush1.msra.mxu0 %v90
    %1425 = vmatprep.subr.mxu0 0.0
    %1426 = vmatpush1.msra.mxu0 %v93
    %1427 = vmatprep.subr.mxu0 0.0
    %1428 = vmatpush1.msra.mxu0 %v96
    %1429 = vmatprep.subr.mxu0 0.0
    %1430 = vmatpush1.msra.mxu0 %v99
    %1431 = vmatprep.subr.mxu0 0.0
    %1432 = vmatpush1.msra.mxu0 0.0
    %1433 = vmatprep.subr.mxu0 0.0
    %1434 = vmatpush1.msra.mxu0 0.0
    %1435 = vmatprep.subr.mxu0 0.0
    %1436 = vmatpush1.msra.mxu0 0.0
    %1437 = vmatprep.subr.mxu0 0.0
    %1438 = vmatpush1.msra.mxu0 0.0
    %1439 = vmatprep.subr.mxu0 0.0
    %1440 = vmatpush1.msra.mxu0 0.0
    %1441 = vmatprep.subr.mxu0 0.0
    %1442 = vmatpush1.msra.mxu0 0.0
    %1443 = vmatprep.subr.mxu0 0.0
    %1444 = vmatpush1.msra.mxu0 0.0
    %1445 = vmatprep.subr.mxu0 0.0
    %1446 = vmatpush1.msra.mxu0 0.0
    %1447 = vmatprep.subr.mxu0 0.0
    %1448 = vmatpush1.msra.mxu0 0.0
    %1449 = vmatprep.subr.mxu0 0.0
    %1450 = vmatpush1.msra.mxu0 0.0
    %1451 = vmatprep.subr.mxu0 0.0
    %1452 = vmatpush1.msra.mxu0 0.0
    %1453 = vmatprep.subr.mxu0 0.0
    %1454 = vmatpush1.msra.mxu0 0.0
    %1455 = vmatprep.subr.mxu0 0.0
    %1456 = vmatpush1.msra.mxu0 0.0
    %1457 = vmatprep.subr.mxu0 0.0
    %1458 = vmatpush1.msra.mxu0 0.0
    %1459 = vmatprep.subr.mxu0 0.0
    %1460 = vmatpush1.msra.mxu0 0.0
    %1461 = vmatprep.subr.mxu0 0.0
    %1462 = vmatpush1.msra.mxu0 0.0
    %1463 = vmatprep.mubr.f32.mxu0 0.0
    %1464 = vmatmul.mubr.f32.gmra.mrb[0].mxu0 %v1325
    %v1465 = vpop.f32.mrb[0].mxu0
    %v1466 = vadd.f32 0.0, %v1465
    %v1467 = vpop.f32.mrb[0].mxu0
    %1468 = vdwg.mxu0
    %v1469 = vadd.f32 %v1327, %v1395
    %v1470 = vxor.u32 %v1469, 2147483648
    %v1471 = vmul.f32 %v1470, 1.442695
    %v1472 = vpow.pop %v1471
    %v1473 = vadd.f32 %v1472, 1.0
    %v1474 = vrcp.pop %v1473
    %v1475 = vmul.f32 1.0, %v1474
    %v1477 = vrot.slane %v1327, 1
    %v1479 = vadd.f32 %v1477, %v1397
    %v1480 = vxor.u32 %v1479, 2147483648
    %v1481 = vmul.f32 %v1480, 1.442695
    %v1482 = vpow.pop %v1481
    %v1483 = vadd.f32 %v1482, 1.0
    %v1484 = vrcp.pop %v1483
    %v1485 = vmul.f32 1.0, %v1484
    %v1486 = vadd.f32 %v1466, %v100
    %v1487 = vmul.f32 %v1475, %v1486
    %v1488 = vrot.slane %v1327, 2
    %v1490 = vadd.f32 %v1488, %v1487
    %v1491 = vtanh.pop %v1490
    %v1492 = vsub.f32 1.0, %v1485
    %v1493 = vmul.f32 %v1492, %v1491
    %v1494 = vmul.f32 %v1485, %v1325
    %v1495 = vadd.f32 %v1493, %v1494
    %s1496 = sadd.s32 %s50, 7
    %p1497 = scmp.lt.s32.totalorder %s1496, 1
    %s1498 = scalar_select %p1497, 1, 0
    %v1499 = vstv %s1498
    %vm1500 = vcmp.eq.s32.totalorder %v1499, 1
    %v1501 = vsel %vm1500, %v1495, %v1325
    %v1503 = vlaneseq
    %v1504 = vshrl.u32 %v1503, 7
    %v1505 = vsub.s32 0, %v1504
    %v1506 = vrot.slane %v445, %v1505
    %v1509 = vlaneseq
    %v1510 = vshrl.u32 %v1509, 7
    %v1511 = vsub.s32 0, %v1510
    %v1512 = vrot.slane %v621, %v1511
    %v1515 = vlaneseq
    %v1516 = vshrl.u32 %v1515, 7
    %v1517 = vsub.s32 0, %v1516
    %v1518 = vrot.slane %v797, %v1517
    %v1521 = vlaneseq
    %v1522 = vshrl.u32 %v1521, 7
    %v1523 = vsub.s32 0, %v1522
    %v1524 = vrot.slane %v973, %v1523
    %v1527 = vlaneseq
    %v1528 = vshrl.u32 %v1527, 7
    %v1529 = vsub.s32 0, %v1528
    %v1530 = vrot.slane %v1149, %v1529
    %v1533 = vlaneseq
    %v1534 = vshrl.u32 %v1533, 7
    %v1535 = vsub.s32 0, %v1534
    %v1536 = vrot.slane %v1325, %v1535
    %v1539 = vlaneseq
    %v1540 = vshrl.u32 %v1539, 7
    %v1541 = vsub.s32 0, %v1540
    %v1542 = vrot.slane %v1501, %v1541
    %vm1544 = vcmask 1040384
    %v1545 = vsel %vm1544, %v269, %v1506
    %vm1546 = vcmask 1041408
    %v1547 = vsel %vm1546, %v1545, %v1512
    %vm1548 = vcmask 1042432
    %v1549 = vsel %vm1548, %v1547, %v1518
    %vm1550 = vcmask 1043456
    %v1551 = vsel %vm1550, %v1549, %v1524
    %vm1552 = vcmask 1044480
    %v1553 = vsel %vm1552, %v1551, %v1530
    %vm1554 = vcmask 1045504
    %v1555 = vsel %vm1554, %v1553, %v1536
    %vm1556 = vcmask 1046528
    %v1557 = vsel %vm1556, %v1555, %v1542
    %1558 = vst [vmem:[#allocation8] sm:$0xff] %v1557
    %1559 = vst [vmem:[#allocation2] sm:$0x1] %v1501
    // Predicated region
    $region30: #{tpu_custom_call.1} parent=1 // pred_check
      _
    $region31: #{tpu_custom_call.1} parent=1 // pred_check_branch
      %1561 = sbr.rel (0) target = $region33
    $region32: #{tpu_custom_call.1} parent=1 // pred_region
      %s1563 = ssub.s32 128, 128
      %1564 = vsyncadd [#allocation5], %s1563
      %s1566 = sshll.u32 [#allocation8], 4
      %s1567 = int_to_ptr.vmem [resolvable:$true] %s1566
      %1569 = dma.vmem_to_hbm [thread:$0]  %s1567, 128, %s4, [#allocation5]
    $region33: #{tpu_custom_call.1} parent=1 // pred_fallthru
      _
    // Predicated region
    $region34: #{tpu_custom_call.1} parent=1 // pred_check
      _
    $region35: #{tpu_custom_call.1} parent=1 // pred_check_branch
      %1571 = sbr.rel (0) target = $region37
    $region36: #{tpu_custom_call.1} parent=1 // pred_region
      %1572 = dma.done [#allocation5], 128
    $region37: #{tpu_custom_call.1} parent=1 // pred_fallthru
      _
    %1573 = vsyncpa [#allocation4], 1
    %1574 = vsyncpa [#allocation7], 1
    %1575 = vsyncpa [#allocation5], 1

</llo_original>
